<compile_context>
chip_gen: v5e
topology: v5e:2x2
jax: 0.10.0
libtpu: 0.0.40
codegen_flags: <defaults>
</compile_context>

<pallas_src>
import functools

import jax
import jax.numpy as jnp
import numpy as np
from jax.experimental import pallas as pl
from jax.experimental.pallas import tpu as pltpu


def _round_up(x, m):
    return (x + m - 1) // m * m


# ----------------------------------------------------------------------------
# Pallas kernel: whole GRU stack + final FC in one invocation (VMEM-resident)
# ----------------------------------------------------------------------------
def make_gru_model_kernel(num_layers, T, Bp, Hp, Cp, din_pads):
    def kernel(x_ref, w_ref, b_ref, out_ref):
        # w_ref: (2*L+1, Wmax, Np) bf16 -- [2l]=W_ih^T, [2l+1]=W_hh^T, [2L]=W_fc^T
        # b_ref: (L+1, 8, Np)      f32  -- [l,0]=gi bias (r,z: b_ih+b_hh; n: b_ih)
        #                                  [l,1,:Hp]=b_hh of the n gate
        #                                  [L,0,:Cp]=b_fc
        # (T, Bp, Dp) -> (T*Bp, Dp); lane dim untouched, sublane dims merged.
        seq = x_ref[...].reshape(T * Bp, din_pads[0]).astype(jnp.bfloat16)
        h = None

        for l in range(num_layers):
            din_p = din_pads[l]
            wih = w_ref[2 * l, :din_p, :3 * Hp]        # (din_p, 3Hp) bf16
            whh = w_ref[2 * l + 1, :Hp, :3 * Hp]       # (Hp,    3Hp) bf16
            b_l = b_ref[l]                             # (8, Np)      f32
            bgi = b_l[0:1, :3 * Hp]                    # (1, 3Hp)
            # Hoisted broadcast of the recurrent n-gate bias (not re-emitted per t).
            bhn_b = jnp.broadcast_to(b_l[1:2, :Hp], (Bp, Hp))

            # Hoisted input projection: one big MXU matmul covering all timesteps.
            gi_all = jnp.dot(seq, wih, preferred_element_type=jnp.float32) + bgi

            h = jnp.zeros((Bp, Hp), jnp.float32)
            last = (l == num_layers - 1)
            outs = []
            for t in range(T):  # T small & static -> fully unrolled, LLO-visible
                gi = gi_all[t * Bp:(t + 1) * Bp, :]           # sublane-aligned slice
                gh = jnp.dot(h.astype(jnp.bfloat16), whh,
                             preferred_element_type=jnp.float32)
                # One fused sigmoid over the contiguous r|z slab (2 lane-aligned vregs).
                rz = jax.nn.sigmoid(gi[:, :2 * Hp] + gh[:, :2 * Hp])
                r = rz[:, :Hp]
                z = rz[:, Hp:2 * Hp]
                n = jnp.tanh(gi[:, 2 * Hp:3 * Hp] + r * (gh[:, 2 * Hp:3 * Hp] + bhn_b))
                h = n + z * (h - n)                           # == (1-z)*n + z*h
                if not last:
                    outs.append(h)
            if not last:
                # Next layer consumes this layer's hidden sequence (stays in VMEM).
                seq = jnp.concatenate(outs, axis=0).astype(jnp.bfloat16)  # (T*Bp, Hp)

        # Final Linear fused onto the last hidden state.
        w_fc = w_ref[2 * num_layers, :Hp, :Cp]         # (Hp, Cp) bf16
        b_fc = b_ref[num_layers][0:1, :Cp]             # (1, Cp)  f32
        out = jnp.dot(h.astype(jnp.bfloat16), w_fc,
                      preferred_element_type=jnp.float32) + b_fc
        out_ref[...] = out.astype(out_ref.dtype)

    return kernel


# ----------------------------------------------------------------------------
# Parameter packing: torch layout -> 2 padded, transposed, lane-aligned slabs
# ----------------------------------------------------------------------------
def pack_params(params, input_size, hidden_size, num_layers, num_classes):
    H = hidden_size
    Hp = _round_up(H, 128)
    Cp = _round_up(num_classes, 128)
    din_pads = [_round_up(input_size, 128)] + [Hp] * (num_layers - 1)
    Wmax = max(din_pads + [Hp])
    Np = max(3 * Hp, Cp)

    w_all = np.zeros((2 * num_layers + 1, Wmax, Np), np.float32)
    b_all = np.zeros((num_layers + 1, 8, Np), np.float32)
    for l in range(num_layers):
        w_ih, w_hh, b_ih, b_hh = (np.asarray(a) for a in params[f"layer{l}"])
        d_in = w_ih.shape[1]
        for g in range(3):                                        # gate order (r, z, n)
            w_all[2 * l, :d_in, g * Hp:g * Hp + H] = w_ih[g * H:(g + 1) * H, :].T
            w_all[2 * l + 1, :H, g * Hp:g * Hp + H] = w_hh[g * H:(g + 1) * H, :].T
        b_all[l, 0, 0 * Hp:0 * Hp + H] = b_ih[0:H] + b_hh[0:H]              # r
        b_all[l, 0, 1 * Hp:1 * Hp + H] = b_ih[H:2 * H] + b_hh[H:2 * H]      # z
        b_all[l, 0, 2 * Hp:2 * Hp + H] = b_ih[2 * H:3 * H]                  # n (input side)
        b_all[l, 1, :H] = b_hh[2 * H:3 * H]                                 # n (recurrent side)
    w_all[2 * num_layers, :H, :num_classes] = np.asarray(params["fc_w"]).T
    b_all[num_layers, 0, :num_classes] = np.asarray(params["fc_b"])
    # bf16 matmul operands (f32 accumulation inside the kernel); biases stay f32.
    return jnp.asarray(w_all, jnp.bfloat16), jnp.asarray(b_all, jnp.float32)


# ----------------------------------------------------------------------------
# Forward wrapper
# ----------------------------------------------------------------------------
@functools.partial(jax.jit, static_argnames=("hidden_size", "num_layers", "num_classes"))
def gru_model_forward(x, w_all, b_all, *, hidden_size, num_layers, num_classes):
    """x: (B, T, input_size) f32, batch-first like the PyTorch module."""
    B, T, D = x.shape
    Hp = _round_up(hidden_size, 128)
    Cp = _round_up(num_classes, 128)
    Bp = max(8, _round_up(B, 8))
    Dp0 = _round_up(D, 128)
    din_pads = tuple([Dp0] + [Hp] * (num_layers - 1))

    # batch-first -> time-major, zero-pad batch/feature dims to (8, 128) tiles.
    x_tm = jnp.transpose(x, (1, 0, 2))                            # (T, B, D)
    x_p = jnp.zeros((T, Bp, Dp0), jnp.float32).at[:, :B, :D].set(x_tm)

    kernel = make_gru_model_kernel(num_layers, T, Bp, Hp, Cp, din_pads)
    # 3 VMEM inputs total (x, packed weights, packed biases) -> 3 startup DMAs.
    out_p = pl.pallas_call(
        kernel,
        out_shape=jax.ShapeDtypeStruct((Bp, Cp), jnp.float32),
        in_specs=[pl.BlockSpec(memory_space=pltpu.MemorySpace.VMEM)] * 3,
        out_specs=pl.BlockSpec(memory_space=pltpu.MemorySpace.VMEM),
    )(x_p, w_all, b_all)
    return out_p[:B, :num_classes]


# ----------------------------------------------------------------------------
# Deterministic parameter init (PyTorch layout & uniform(-1/sqrt(H), 1/sqrt(H)))
# ----------------------------------------------------------------------------
def init_params(key, input_size, hidden_size, num_layers, num_classes):
    params = {}
    k = 1.0 / np.sqrt(hidden_size)
    for layer in range(num_layers):
        d_in = input_size if layer == 0 else hidden_size
        key, k1, k2, k3, k4 = jax.random.split(key, 5)
        w_ih = jax.random.uniform(k1, (3 * hidden_size, d_in), jnp.float32, -k, k)
        w_hh = jax.random.uniform(k2, (3 * hidden_size, hidden_size), jnp.float32, -k, k)
        b_ih = jax.random.uniform(k3, (3 * hidden_size,), jnp.float32, -k, k)
        b_hh = jax.random.uniform(k4, (3 * hidden_size,), jnp.float32, -k, k)
        params[f"layer{layer}"] = (w_ih, w_hh, b_ih, b_hh)
    key, k5, k6 = jax.random.split(key, 3)
    params["fc_w"] = jax.random.uniform(k5, (num_classes, hidden_size), jnp.float32, -k, k)
    params["fc_b"] = jax.random.uniform(k6, (num_classes,), jnp.float32, -k, k)
    return params


# ----------------------------------------------------------------------------
# Pure-JAX reference (exact torch.nn.GRU math). matmul_dtype=bf16 mirrors the
# kernel's mixed-precision matmuls for a tight correctness check.
# ----------------------------------------------------------------------------
def reference_forward(x, params, num_layers, hidden_size, matmul_dtype=jnp.float32):
    B, T, _ = x.shape
    H = hidden_size

    def mm(a, b):
        return jnp.dot(a.astype(matmul_dtype), b.astype(matmul_dtype),
                       preferred_element_type=jnp.float32)

    h_seq = x
    for layer in range(num_layers):
        w_ih, w_hh, b_ih, b_hh = params[f"layer{layer}"]
        h = jnp.zeros((B, H), jnp.float32)
        outs = []
        for t in range(T):
            gi = mm(h_seq[:, t, :], w_ih.T) + b_ih
            gh = mm(h, w_hh.T) + b_hh
            r = jax.nn.sigmoid(gi[:, :H] + gh[:, :H])
            z = jax.nn.sigmoid(gi[:, H:2 * H] + gh[:, H:2 * H])
            n = jnp.tanh(gi[:, 2 * H:] + r * gh[:, 2 * H:])
            h = (1.0 - z) * n + z * h
            outs.append(h)
        h_seq = jnp.stack(outs, axis=1)
    return mm(h_seq[:, -1, :], params["fc_w"].T) + params["fc_b"]


# ----------------------------------------------------------------------------
if __name__ == "__main__":
    batch, seq_len = 2, 8
    input_size, hidden_size, num_layers, num_classes = 16, 32, 2, 4

    key = jax.random.PRNGKey(0)
    key, kx, kp = jax.random.split(key, 3)
    x = jax.random.normal(kx, (batch, seq_len, input_size), jnp.float32)
    params = init_params(kp, input_size, hidden_size, num_layers, num_classes)
    w_all, b_all = pack_params(params, input_size, hidden_size, num_layers, num_classes)

    out = gru_model_forward(x, w_all, b_all, hidden_size=hidden_size,
                            num_layers=num_layers, num_classes=num_classes)
    out = jax.block_until_ready(out)

    # Tight check: reference with the same bf16 matmul-operand cast (verifies the
    # kernel's gate math / layout / bias handling exactly).
    ref_bf16 = reference_forward(x, params, num_layers, hidden_size,
                                 matmul_dtype=jnp.bfloat16)
    np.testing.assert_allclose(np.asarray(out), np.asarray(ref_bf16),
                               rtol=2e-3, atol=2e-3)

    # Loose sanity check vs. exact f32 torch.nn.GRU math; the only difference is
    # bf16 quantization of the matmul operands.
    ref_f32 = reference_forward(x, params, num_layers, hidden_size,
                                matmul_dtype=jnp.float32)
    np.testing.assert_allclose(np.asarray(out), np.asarray(ref_f32),
                               rtol=1e-1, atol=1e-1)

    assert out.shape == (batch, num_classes)
    print("KERNEL_OK")
</pallas_src>

<mosaic_0001>
module attributes {stable_mosaic.version = 11 : i64} {
  func.func @kernel(%arg0: memref<8x8x128xf32, #tpu.memory_space<vmem>>, %arg1: memref<5x128x384xbf16, #tpu.memory_space<vmem>>, %arg2: memref<3x8x384xf32, #tpu.memory_space<vmem>>, %arg3: memref<8x128xf32, #tpu.memory_space<vmem>>) attributes {dimension_semantics = [], scalar_prefetch = 0 : i64, scratch_operands = 0 : i64, tpu.core_type = #tpu.core_type<tc>} {
    %c0 = arith.constant 0 : index
    %c0_0 = arith.constant 0 : index
    %c0_1 = arith.constant 0 : index
    %0 = vector.load %arg0[%c0, %c0_0, %c0_1] : memref<8x8x128xf32, #tpu.memory_space<vmem>>, vector<8x8x128xf32>
    %1 = vector.shape_cast %0 : vector<8x8x128xf32> to vector<64x128xf32>
    %2 = arith.truncf %1 : vector<64x128xf32> to vector<64x128xbf16>
    %c0_2 = arith.constant 0 : index
    %c0_3 = arith.constant 0 : index
    %c0_4 = arith.constant 0 : index
    %3 = vector.load %arg1[%c0_2, %c0_3, %c0_4] : memref<5x128x384xbf16, #tpu.memory_space<vmem>>, vector<1x128x384xbf16>
    %4 = vector.shape_cast %3 : vector<1x128x384xbf16> to vector<128x384xbf16>
    %c1 = arith.constant 1 : index
    %c0_5 = arith.constant 0 : index
    %c0_6 = arith.constant 0 : index
    %5 = vector.load %arg1[%c1, %c0_5, %c0_6] : memref<5x128x384xbf16, #tpu.memory_space<vmem>>, vector<1x128x384xbf16>
    %6 = vector.shape_cast %5 : vector<1x128x384xbf16> to vector<128x384xbf16>
    %c0_7 = arith.constant 0 : index
    %c0_8 = arith.constant 0 : index
    %c0_9 = arith.constant 0 : index
    %7 = vector.load %arg2[%c0_7, %c0_8, %c0_9] : memref<3x8x384xf32, #tpu.memory_space<vmem>>, vector<1x8x384xf32>
    %8 = vector.shape_cast %7 : vector<1x8x384xf32> to vector<8x384xf32>
    %9 = vector.extract_strided_slice %8 {offsets = [0, 0], sizes = [1, 384], strides = [1, 1]} : vector<8x384xf32> to vector<1x384xf32>
    %10 = vector.extract_strided_slice %8 {offsets = [1, 0], sizes = [1, 128], strides = [1, 1]} : vector<8x384xf32> to vector<1x128xf32>
    %11 = vector.shape_cast %10 : vector<1x128xf32> to vector<1x128xf32>
    %12 = vector.broadcast %11 : vector<1x128xf32> to vector<8x128xf32>
    %cst = arith.constant dense<0.000000e+00> : vector<64x384xf32>
    %13 = tpu.matmul %2, %4, %cst {dimension_numbers = #tpu.dot_dimension_numbers<[1], [0], [0], [1], [0, 0, 1, 1], [], []>} : vector<64x128xbf16>, vector<128x384xbf16>, vector<64x384xf32> -> vector<64x384xf32>
    %14 = vector.broadcast %9 : vector<1x384xf32> to vector<64x384xf32>
    %15 = arith.addf %13, %14 : vector<64x384xf32>
    %cst_10 = arith.constant 0.000000e+00 : f32
    %16 = vector.broadcast %cst_10 : f32 to vector<8x128xf32>
    %17 = vector.extract_strided_slice %15 {offsets = [0, 0], sizes = [8, 384], strides = [1, 1]} : vector<64x384xf32> to vector<8x384xf32>
    %18 = arith.truncf %16 : vector<8x128xf32> to vector<8x128xbf16>
    %cst_11 = arith.constant dense<0.000000e+00> : vector<8x384xf32>
    %19 = tpu.matmul %18, %6, %cst_11 {dimension_numbers = #tpu.dot_dimension_numbers<[1], [0], [0], [1], [0, 0, 1, 1], [], []>} : vector<8x128xbf16>, vector<128x384xbf16>, vector<8x384xf32> -> vector<8x384xf32>
    %20 = vector.extract_strided_slice %17 {offsets = [0, 0], sizes = [8, 256], strides = [1, 1]} : vector<8x384xf32> to vector<8x256xf32>
    %21 = vector.extract_strided_slice %19 {offsets = [0, 0], sizes = [8, 256], strides = [1, 1]} : vector<8x384xf32> to vector<8x256xf32>
    %22 = arith.addf %20, %21 : vector<8x256xf32>
    %23 = arith.negf %22 : vector<8x256xf32>
    %24 = math.exp %23 : vector<8x256xf32>
    %cst_12 = arith.constant 1.000000e+00 : f32
    %25 = vector.broadcast %cst_12 : f32 to vector<8x256xf32>
    %26 = arith.addf %25, %24 : vector<8x256xf32>
    %27 = arith.divf %25, %26 : vector<8x256xf32>
    %28 = vector.extract_strided_slice %27 {offsets = [0, 0], sizes = [8, 128], strides = [1, 1]} : vector<8x256xf32> to vector<8x128xf32>
    %29 = vector.extract_strided_slice %27 {offsets = [0, 128], sizes = [8, 128], strides = [1, 1]} : vector<8x256xf32> to vector<8x128xf32>
    %30 = vector.extract_strided_slice %17 {offsets = [0, 256], sizes = [8, 128], strides = [1, 1]} : vector<8x384xf32> to vector<8x128xf32>
    %31 = vector.extract_strided_slice %19 {offsets = [0, 256], sizes = [8, 128], strides = [1, 1]} : vector<8x384xf32> to vector<8x128xf32>
    %32 = arith.addf %31, %12 : vector<8x128xf32>
    %33 = arith.mulf %28, %32 : vector<8x128xf32>
    %34 = arith.addf %30, %33 : vector<8x128xf32>
    %35 = math.tanh %34 : vector<8x128xf32>
    %36 = arith.subf %16, %35 : vector<8x128xf32>
    %37 = arith.mulf %29, %36 : vector<8x128xf32>
    %38 = arith.addf %35, %37 : vector<8x128xf32>
    %39 = vector.extract_strided_slice %15 {offsets = [8, 0], sizes = [8, 384], strides = [1, 1]} : vector<64x384xf32> to vector<8x384xf32>
    %40 = arith.truncf %38 : vector<8x128xf32> to vector<8x128xbf16>
    %cst_13 = arith.constant dense<0.000000e+00> : vector<8x384xf32>
    %41 = tpu.matmul %40, %6, %cst_13 {dimension_numbers = #tpu.dot_dimension_numbers<[1], [0], [0], [1], [0, 0, 1, 1], [], []>} : vector<8x128xbf16>, vector<128x384xbf16>, vector<8x384xf32> -> vector<8x384xf32>
    %42 = vector.extract_strided_slice %39 {offsets = [0, 0], sizes = [8, 256], strides = [1, 1]} : vector<8x384xf32> to vector<8x256xf32>
    %43 = vector.extract_strided_slice %41 {offsets = [0, 0], sizes = [8, 256], strides = [1, 1]} : vector<8x384xf32> to vector<8x256xf32>
    %44 = arith.addf %42, %43 : vector<8x256xf32>
    %45 = arith.negf %44 : vector<8x256xf32>
    %46 = math.exp %45 : vector<8x256xf32>
    %cst_14 = arith.constant 1.000000e+00 : f32
    %47 = vector.broadcast %cst_14 : f32 to vector<8x256xf32>
    %48 = arith.addf %47, %46 : vector<8x256xf32>
    %49 = arith.divf %47, %48 : vector<8x256xf32>
    %50 = vector.extract_strided_slice %49 {offsets = [0, 0], sizes = [8, 128], strides = [1, 1]} : vector<8x256xf32> to vector<8x128xf32>
    %51 = vector.extract_strided_slice %49 {offsets = [0, 128], sizes = [8, 128], strides = [1, 1]} : vector<8x256xf32> to vector<8x128xf32>
    %52 = vector.extract_strided_slice %39 {offsets = [0, 256], sizes = [8, 128], strides = [1, 1]} : vector<8x384xf32> to vector<8x128xf32>
    %53 = vector.extract_strided_slice %41 {offsets = [0, 256], sizes = [8, 128], strides = [1, 1]} : vector<8x384xf32> to vector<8x128xf32>
    %54 = arith.addf %53, %12 : vector<8x128xf32>
    %55 = arith.mulf %50, %54 : vector<8x128xf32>
    %56 = arith.addf %52, %55 : vector<8x128xf32>
    %57 = math.tanh %56 : vector<8x128xf32>
    %58 = arith.subf %38, %57 : vector<8x128xf32>
    %59 = arith.mulf %51, %58 : vector<8x128xf32>
    %60 = arith.addf %57, %59 : vector<8x128xf32>
    %61 = vector.extract_strided_slice %15 {offsets = [16, 0], sizes = [8, 384], strides = [1, 1]} : vector<64x384xf32> to vector<8x384xf32>
    %62 = arith.truncf %60 : vector<8x128xf32> to vector<8x128xbf16>
    %cst_15 = arith.constant dense<0.000000e+00> : vector<8x384xf32>
    %63 = tpu.matmul %62, %6, %cst_15 {dimension_numbers = #tpu.dot_dimension_numbers<[1], [0], [0], [1], [0, 0, 1, 1], [], []>} : vector<8x128xbf16>, vector<128x384xbf16>, vector<8x384xf32> -> vector<8x384xf32>
    %64 = vector.extract_strided_slice %61 {offsets = [0, 0], sizes = [8, 256], strides = [1, 1]} : vector<8x384xf32> to vector<8x256xf32>
    %65 = vector.extract_strided_slice %63 {offsets = [0, 0], sizes = [8, 256], strides = [1, 1]} : vector<8x384xf32> to vector<8x256xf32>
    %66 = arith.addf %64, %65 : vector<8x256xf32>
    %67 = arith.negf %66 : vector<8x256xf32>
    %68 = math.exp %67 : vector<8x256xf32>
    %cst_16 = arith.constant 1.000000e+00 : f32
    %69 = vector.broadcast %cst_16 : f32 to vector<8x256xf32>
    %70 = arith.addf %69, %68 : vector<8x256xf32>
    %71 = arith.divf %69, %70 : vector<8x256xf32>
    %72 = vector.extract_strided_slice %71 {offsets = [0, 0], sizes = [8, 128], strides = [1, 1]} : vector<8x256xf32> to vector<8x128xf32>
    %73 = vector.extract_strided_slice %71 {offsets = [0, 128], sizes = [8, 128], strides = [1, 1]} : vector<8x256xf32> to vector<8x128xf32>
    %74 = vector.extract_strided_slice %61 {offsets = [0, 256], sizes = [8, 128], strides = [1, 1]} : vector<8x384xf32> to vector<8x128xf32>
    %75 = vector.extract_strided_slice %63 {offsets = [0, 256], sizes = [8, 128], strides = [1, 1]} : vector<8x384xf32> to vector<8x128xf32>
    %76 = arith.addf %75, %12 : vector<8x128xf32>
    %77 = arith.mulf %72, %76 : vector<8x128xf32>
    %78 = arith.addf %74, %77 : vector<8x128xf32>
    %79 = math.tanh %78 : vector<8x128xf32>
    %80 = arith.subf %60, %79 : vector<8x128xf32>
    %81 = arith.mulf %73, %80 : vector<8x128xf32>
    %82 = arith.addf %79, %81 : vector<8x128xf32>
    %83 = vector.extract_strided_slice %15 {offsets = [24, 0], sizes = [8, 384], strides = [1, 1]} : vector<64x384xf32> to vector<8x384xf32>
    %84 = arith.truncf %82 : vector<8x128xf32> to vector<8x128xbf16>
    %cst_17 = arith.constant dense<0.000000e+00> : vector<8x384xf32>
    %85 = tpu.matmul %84, %6, %cst_17 {dimension_numbers = #tpu.dot_dimension_numbers<[1], [0], [0], [1], [0, 0, 1, 1], [], []>} : vector<8x128xbf16>, vector<128x384xbf16>, vector<8x384xf32> -> vector<8x384xf32>
    %86 = vector.extract_strided_slice %83 {offsets = [0, 0], sizes = [8, 256], strides = [1, 1]} : vector<8x384xf32> to vector<8x256xf32>
    %87 = vector.extract_strided_slice %85 {offsets = [0, 0], sizes = [8, 256], strides = [1, 1]} : vector<8x384xf32> to vector<8x256xf32>
    %88 = arith.addf %86, %87 : vector<8x256xf32>
    %89 = arith.negf %88 : vector<8x256xf32>
    %90 = math.exp %89 : vector<8x256xf32>
    %cst_18 = arith.constant 1.000000e+00 : f32
    %91 = vector.broadcast %cst_18 : f32 to vector<8x256xf32>
    %92 = arith.addf %91, %90 : vector<8x256xf32>
    %93 = arith.divf %91, %92 : vector<8x256xf32>
    %94 = vector.extract_strided_slice %93 {offsets = [0, 0], sizes = [8, 128], strides = [1, 1]} : vector<8x256xf32> to vector<8x128xf32>
    %95 = vector.extract_strided_slice %93 {offsets = [0, 128], sizes = [8, 128], strides = [1, 1]} : vector<8x256xf32> to vector<8x128xf32>
    %96 = vector.extract_strided_slice %83 {offsets = [0, 256], sizes = [8, 128], strides = [1, 1]} : vector<8x384xf32> to vector<8x128xf32>
    %97 = vector.extract_strided_slice %85 {offsets = [0, 256], sizes = [8, 128], strides = [1, 1]} : vector<8x384xf32> to vector<8x128xf32>
    %98 = arith.addf %97, %12 : vector<8x128xf32>
    %99 = arith.mulf %94, %98 : vector<8x128xf32>
    %100 = arith.addf %96, %99 : vector<8x128xf32>
    %101 = math.tanh %100 : vector<8x128xf32>
    %102 = arith.subf %82, %101 : vector<8x128xf32>
    %103 = arith.mulf %95, %102 : vector<8x128xf32>
    %104 = arith.addf %101, %103 : vector<8x128xf32>
    %105 = vector.extract_strided_slice %15 {offsets = [32, 0], sizes = [8, 384], strides = [1, 1]} : vector<64x384xf32> to vector<8x384xf32>
    %106 = arith.truncf %104 : vector<8x128xf32> to vector<8x128xbf16>
    %cst_19 = arith.constant dense<0.000000e+00> : vector<8x384xf32>
    %107 = tpu.matmul %106, %6, %cst_19 {dimension_numbers = #tpu.dot_dimension_numbers<[1], [0], [0], [1], [0, 0, 1, 1], [], []>} : vector<8x128xbf16>, vector<128x384xbf16>, vector<8x384xf32> -> vector<8x384xf32>
    %108 = vector.extract_strided_slice %105 {offsets = [0, 0], sizes = [8, 256], strides = [1, 1]} : vector<8x384xf32> to vector<8x256xf32>
    %109 = vector.extract_strided_slice %107 {offsets = [0, 0], sizes = [8, 256], strides = [1, 1]} : vector<8x384xf32> to vector<8x256xf32>
    %110 = arith.addf %108, %109 : vector<8x256xf32>
    %111 = arith.negf %110 : vector<8x256xf32>
    %112 = math.exp %111 : vector<8x256xf32>
    %cst_20 = arith.constant 1.000000e+00 : f32
    %113 = vector.broadcast %cst_20 : f32 to vector<8x256xf32>
    %114 = arith.addf %113, %112 : vector<8x256xf32>
    %115 = arith.divf %113, %114 : vector<8x256xf32>
    %116 = vector.extract_strided_slice %115 {offsets = [0, 0], sizes = [8, 128], strides = [1, 1]} : vector<8x256xf32> to vector<8x128xf32>
    %117 = vector.extract_strided_slice %115 {offsets = [0, 128], sizes = [8, 128], strides = [1, 1]} : vector<8x256xf32> to vector<8x128xf32>
    %118 = vector.extract_strided_slice %105 {offsets = [0, 256], sizes = [8, 128], strides = [1, 1]} : vector<8x384xf32> to vector<8x128xf32>
    %119 = vector.extract_strided_slice %107 {offsets = [0, 256], sizes = [8, 128], strides = [1, 1]} : vector<8x384xf32> to vector<8x128xf32>
    %120 = arith.addf %119, %12 : vector<8x128xf32>
    %121 = arith.mulf %116, %120 : vector<8x128xf32>
    %122 = arith.addf %118, %121 : vector<8x128xf32>
    %123 = math.tanh %122 : vector<8x128xf32>
    %124 = arith.subf %104, %123 : vector<8x128xf32>
    %125 = arith.mulf %117, %124 : vector<8x128xf32>
    %126 = arith.addf %123, %125 : vector<8x128xf32>
    %127 = vector.extract_strided_slice %15 {offsets = [40, 0], sizes = [8, 384], strides = [1, 1]} : vector<64x384xf32> to vector<8x384xf32>
    %128 = arith.truncf %126 : vector<8x128xf32> to vector<8x128xbf16>
    %cst_21 = arith.constant dense<0.000000e+00> : vector<8x384xf32>
    %129 = tpu.matmul %128, %6, %cst_21 {dimension_numbers = #tpu.dot_dimension_numbers<[1], [0], [0], [1], [0, 0, 1, 1], [], []>} : vector<8x128xbf16>, vector<128x384xbf16>, vector<8x384xf32> -> vector<8x384xf32>
    %130 = vector.extract_strided_slice %127 {offsets = [0, 0], sizes = [8, 256], strides = [1, 1]} : vector<8x384xf32> to vector<8x256xf32>
    %131 = vector.extract_strided_slice %129 {offsets = [0, 0], sizes = [8, 256], strides = [1, 1]} : vector<8x384xf32> to vector<8x256xf32>
    %132 = arith.addf %130, %131 : vector<8x256xf32>
    %133 = arith.negf %132 : vector<8x256xf32>
    %134 = math.exp %133 : vector<8x256xf32>
    %cst_22 = arith.constant 1.000000e+00 : f32
    %135 = vector.broadcast %cst_22 : f32 to vector<8x256xf32>
    %136 = arith.addf %135, %134 : vector<8x256xf32>
    %137 = arith.divf %135, %136 : vector<8x256xf32>
    %138 = vector.extract_strided_slice %137 {offsets = [0, 0], sizes = [8, 128], strides = [1, 1]} : vector<8x256xf32> to vector<8x128xf32>
    %139 = vector.extract_strided_slice %137 {offsets = [0, 128], sizes = [8, 128], strides = [1, 1]} : vector<8x256xf32> to vector<8x128xf32>
    %140 = vector.extract_strided_slice %127 {offsets = [0, 256], sizes = [8, 128], strides = [1, 1]} : vector<8x384xf32> to vector<8x128xf32>
    %141 = vector.extract_strided_slice %129 {offsets = [0, 256], sizes = [8, 128], strides = [1, 1]} : vector<8x384xf32> to vector<8x128xf32>
    %142 = arith.addf %141, %12 : vector<8x128xf32>
    %143 = arith.mulf %138, %142 : vector<8x128xf32>
    %144 = arith.addf %140, %143 : vector<8x128xf32>
    %145 = math.tanh %144 : vector<8x128xf32>
    %146 = arith.subf %126, %145 : vector<8x128xf32>
    %147 = arith.mulf %139, %146 : vector<8x128xf32>
    %148 = arith.addf %145, %147 : vector<8x128xf32>
    %149 = vector.extract_strided_slice %15 {offsets = [48, 0], sizes = [8, 384], strides = [1, 1]} : vector<64x384xf32> to vector<8x384xf32>
    %150 = arith.truncf %148 : vector<8x128xf32> to vector<8x128xbf16>
    %cst_23 = arith.constant dense<0.000000e+00> : vector<8x384xf32>
    %151 = tpu.matmul %150, %6, %cst_23 {dimension_numbers = #tpu.dot_dimension_numbers<[1], [0], [0], [1], [0, 0, 1, 1], [], []>} : vector<8x128xbf16>, vector<128x384xbf16>, vector<8x384xf32> -> vector<8x384xf32>
    %152 = vector.extract_strided_slice %149 {offsets = [0, 0], sizes = [8, 256], strides = [1, 1]} : vector<8x384xf32> to vector<8x256xf32>
    %153 = vector.extract_strided_slice %151 {offsets = [0, 0], sizes = [8, 256], strides = [1, 1]} : vector<8x384xf32> to vector<8x256xf32>
    %154 = arith.addf %152, %153 : vector<8x256xf32>
    %155 = arith.negf %154 : vector<8x256xf32>
    %156 = math.exp %155 : vector<8x256xf32>
    %cst_24 = arith.constant 1.000000e+00 : f32
    %157 = vector.broadcast %cst_24 : f32 to vector<8x256xf32>
    %158 = arith.addf %157, %156 : vector<8x256xf32>
    %159 = arith.divf %157, %158 : vector<8x256xf32>
    %160 = vector.extract_strided_slice %159 {offsets = [0, 0], sizes = [8, 128], strides = [1, 1]} : vector<8x256xf32> to vector<8x128xf32>
    %161 = vector.extract_strided_slice %159 {offsets = [0, 128], sizes = [8, 128], strides = [1, 1]} : vector<8x256xf32> to vector<8x128xf32>
    %162 = vector.extract_strided_slice %149 {offsets = [0, 256], sizes = [8, 128], strides = [1, 1]} : vector<8x384xf32> to vector<8x128xf32>
    %163 = vector.extract_strided_slice %151 {offsets = [0, 256], sizes = [8, 128], strides = [1, 1]} : vector<8x384xf32> to vector<8x128xf32>
    %164 = arith.addf %163, %12 : vector<8x128xf32>
    %165 = arith.mulf %160, %164 : vector<8x128xf32>
    %166 = arith.addf %162, %165 : vector<8x128xf32>
    %167 = math.tanh %166 : vector<8x128xf32>
    %168 = arith.subf %148, %167 : vector<8x128xf32>
    %169 = arith.mulf %161, %168 : vector<8x128xf32>
    %170 = arith.addf %167, %169 : vector<8x128xf32>
    %171 = vector.extract_strided_slice %15 {offsets = [56, 0], sizes = [8, 384], strides = [1, 1]} : vector<64x384xf32> to vector<8x384xf32>
    %172 = arith.truncf %170 : vector<8x128xf32> to vector<8x128xbf16>
    %cst_25 = arith.constant dense<0.000000e+00> : vector<8x384xf32>
    %173 = tpu.matmul %172, %6, %cst_25 {dimension_numbers = #tpu.dot_dimension_numbers<[1], [0], [0], [1], [0, 0, 1, 1], [], []>} : vector<8x128xbf16>, vector<128x384xbf16>, vector<8x384xf32> -> vector<8x384xf32>
    %174 = vector.extract_strided_slice %171 {offsets = [0, 0], sizes = [8, 256], strides = [1, 1]} : vector<8x384xf32> to vector<8x256xf32>
    %175 = vector.extract_strided_slice %173 {offsets = [0, 0], sizes = [8, 256], strides = [1, 1]} : vector<8x384xf32> to vector<8x256xf32>
    %176 = arith.addf %174, %175 : vector<8x256xf32>
    %177 = arith.negf %176 : vector<8x256xf32>
    %178 = math.exp %177 : vector<8x256xf32>
    %cst_26 = arith.constant 1.000000e+00 : f32
    %179 = vector.broadcast %cst_26 : f32 to vector<8x256xf32>
    %180 = arith.addf %179, %178 : vector<8x256xf32>
    %181 = arith.divf %179, %180 : vector<8x256xf32>
    %182 = vector.extract_strided_slice %181 {offsets = [0, 0], sizes = [8, 128], strides = [1, 1]} : vector<8x256xf32> to vector<8x128xf32>
    %183 = vector.extract_strided_slice %181 {offsets = [0, 128], sizes = [8, 128], strides = [1, 1]} : vector<8x256xf32> to vector<8x128xf32>
    %184 = vector.extract_strided_slice %171 {offsets = [0, 256], sizes = [8, 128], strides = [1, 1]} : vector<8x384xf32> to vector<8x128xf32>
    %185 = vector.extract_strided_slice %173 {offsets = [0, 256], sizes = [8, 128], strides = [1, 1]} : vector<8x384xf32> to vector<8x128xf32>
    %186 = arith.addf %185, %12 : vector<8x128xf32>
    %187 = arith.mulf %182, %186 : vector<8x128xf32>
    %188 = arith.addf %184, %187 : vector<8x128xf32>
    %189 = math.tanh %188 : vector<8x128xf32>
    %190 = arith.subf %170, %189 : vector<8x128xf32>
    %191 = arith.mulf %183, %190 : vector<8x128xf32>
    %192 = arith.addf %189, %191 : vector<8x128xf32>
    %193 = tpu.concatenate %38, %60, %82, %104, %126, %148, %170, %192 in 0 : vector<8x128xf32>, vector<8x128xf32>, vector<8x128xf32>, vector<8x128xf32>, vector<8x128xf32>, vector<8x128xf32>, vector<8x128xf32>, vector<8x128xf32> -> vector<64x128xf32>
    %194 = arith.truncf %193 : vector<64x128xf32> to vector<64x128xbf16>
    %c2 = arith.constant 2 : index
    %c0_27 = arith.constant 0 : index
    %c0_28 = arith.constant 0 : index
    %195 = vector.load %arg1[%c2, %c0_27, %c0_28] : memref<5x128x384xbf16, #tpu.memory_space<vmem>>, vector<1x128x384xbf16>
    %196 = vector.shape_cast %195 : vector<1x128x384xbf16> to vector<128x384xbf16>
    %c3 = arith.constant 3 : index
    %c0_29 = arith.constant 0 : index
    %c0_30 = arith.constant 0 : index
    %197 = vector.load %arg1[%c3, %c0_29, %c0_30] : memref<5x128x384xbf16, #tpu.memory_space<vmem>>, vector<1x128x384xbf16>
    %198 = vector.shape_cast %197 : vector<1x128x384xbf16> to vector<128x384xbf16>
    %c1_31 = arith.constant 1 : index
    %c0_32 = arith.constant 0 : index
    %c0_33 = arith.constant 0 : index
    %199 = vector.load %arg2[%c1_31, %c0_32, %c0_33] : memref<3x8x384xf32, #tpu.memory_space<vmem>>, vector<1x8x384xf32>
    %200 = vector.shape_cast %199 : vector<1x8x384xf32> to vector<8x384xf32>
    %201 = vector.extract_strided_slice %200 {offsets = [0, 0], sizes = [1, 384], strides = [1, 1]} : vector<8x384xf32> to vector<1x384xf32>
    %202 = vector.extract_strided_slice %200 {offsets = [1, 0], sizes = [1, 128], strides = [1, 1]} : vector<8x384xf32> to vector<1x128xf32>
    %203 = vector.shape_cast %202 : vector<1x128xf32> to vector<1x128xf32>
    %204 = vector.broadcast %203 : vector<1x128xf32> to vector<8x128xf32>
    %cst_34 = arith.constant dense<0.000000e+00> : vector<64x384xf32>
    %205 = tpu.matmul %194, %196, %cst_34 {dimension_numbers = #tpu.dot_dimension_numbers<[1], [0], [0], [1], [0, 0, 1, 1], [], []>} : vector<64x128xbf16>, vector<128x384xbf16>, vector<64x384xf32> -> vector<64x384xf32>
    %206 = vector.broadcast %201 : vector<1x384xf32> to vector<64x384xf32>
    %207 = arith.addf %205, %206 : vector<64x384xf32>
    %cst_35 = arith.constant 0.000000e+00 : f32
    %208 = vector.broadcast %cst_35 : f32 to vector<8x128xf32>
    %209 = vector.extract_strided_slice %207 {offsets = [0, 0], sizes = [8, 384], strides = [1, 1]} : vector<64x384xf32> to vector<8x384xf32>
    %210 = arith.truncf %208 : vector<8x128xf32> to vector<8x128xbf16>
    %cst_36 = arith.constant dense<0.000000e+00> : vector<8x384xf32>
    %211 = tpu.matmul %210, %198, %cst_36 {dimension_numbers = #tpu.dot_dimension_numbers<[1], [0], [0], [1], [0, 0, 1, 1], [], []>} : vector<8x128xbf16>, vector<128x384xbf16>, vector<8x384xf32> -> vector<8x384xf32>
    %212 = vector.extract_strided_slice %209 {offsets = [0, 0], sizes = [8, 256], strides = [1, 1]} : vector<8x384xf32> to vector<8x256xf32>
    %213 = vector.extract_strided_slice %211 {offsets = [0, 0], sizes = [8, 256], strides = [1, 1]} : vector<8x384xf32> to vector<8x256xf32>
    %214 = arith.addf %212, %213 : vector<8x256xf32>
    %215 = arith.negf %214 : vector<8x256xf32>
    %216 = math.exp %215 : vector<8x256xf32>
    %cst_37 = arith.constant 1.000000e+00 : f32
    %217 = vector.broadcast %cst_37 : f32 to vector<8x256xf32>
    %218 = arith.addf %217, %216 : vector<8x256xf32>
    %219 = arith.divf %217, %218 : vector<8x256xf32>
    %220 = vector.extract_strided_slice %219 {offsets = [0, 0], sizes = [8, 128], strides = [1, 1]} : vector<8x256xf32> to vector<8x128xf32>
    %221 = vector.extract_strided_slice %219 {offsets = [0, 128], sizes = [8, 128], strides = [1, 1]} : vector<8x256xf32> to vector<8x128xf32>
    %222 = vector.extract_strided_slice %209 {offsets = [0, 256], sizes = [8, 128], strides = [1, 1]} : vector<8x384xf32> to vector<8x128xf32>
    %223 = vector.extract_strided_slice %211 {offsets = [0, 256], sizes = [8, 128], strides = [1, 1]} : vector<8x384xf32> to vector<8x128xf32>
    %224 = arith.addf %223, %204 : vector<8x128xf32>
    %225 = arith.mulf %220, %224 : vector<8x128xf32>
    %226 = arith.addf %222, %225 : vector<8x128xf32>
    %227 = math.tanh %226 : vector<8x128xf32>
    %228 = arith.subf %208, %227 : vector<8x128xf32>
    %229 = arith.mulf %221, %228 : vector<8x128xf32>
    %230 = arith.addf %227, %229 : vector<8x128xf32>
    %231 = vector.extract_strided_slice %207 {offsets = [8, 0], sizes = [8, 384], strides = [1, 1]} : vector<64x384xf32> to vector<8x384xf32>
    %232 = arith.truncf %230 : vector<8x128xf32> to vector<8x128xbf16>
    %cst_38 = arith.constant dense<0.000000e+00> : vector<8x384xf32>
    %233 = tpu.matmul %232, %198, %cst_38 {dimension_numbers = #tpu.dot_dimension_numbers<[1], [0], [0], [1], [0, 0, 1, 1], [], []>} : vector<8x128xbf16>, vector<128x384xbf16>, vector<8x384xf32> -> vector<8x384xf32>
    %234 = vector.extract_strided_slice %231 {offsets = [0, 0], sizes = [8, 256], strides = [1, 1]} : vector<8x384xf32> to vector<8x256xf32>
    %235 = vector.extract_strided_slice %233 {offsets = [0, 0], sizes = [8, 256], strides = [1, 1]} : vector<8x384xf32> to vector<8x256xf32>
    %236 = arith.addf %234, %235 : vector<8x256xf32>
    %237 = arith.negf %236 : vector<8x256xf32>
    %238 = math.exp %237 : vector<8x256xf32>
    %cst_39 = arith.constant 1.000000e+00 : f32
    %239 = vector.broadcast %cst_39 : f32 to vector<8x256xf32>
    %240 = arith.addf %239, %238 : vector<8x256xf32>
    %241 = arith.divf %239, %240 : vector<8x256xf32>
    %242 = vector.extract_strided_slice %241 {offsets = [0, 0], sizes = [8, 128], strides = [1, 1]} : vector<8x256xf32> to vector<8x128xf32>
    %243 = vector.extract_strided_slice %241 {offsets = [0, 128], sizes = [8, 128], strides = [1, 1]} : vector<8x256xf32> to vector<8x128xf32>
    %244 = vector.extract_strided_slice %231 {offsets = [0, 256], sizes = [8, 128], strides = [1, 1]} : vector<8x384xf32> to vector<8x128xf32>
    %245 = vector.extract_strided_slice %233 {offsets = [0, 256], sizes = [8, 128], strides = [1, 1]} : vector<8x384xf32> to vector<8x128xf32>
    %246 = arith.addf %245, %204 : vector<8x128xf32>
    %247 = arith.mulf %242, %246 : vector<8x128xf32>
    %248 = arith.addf %244, %247 : vector<8x128xf32>
    %249 = math.tanh %248 : vector<8x128xf32>
    %250 = arith.subf %230, %249 : vector<8x128xf32>
    %251 = arith.mulf %243, %250 : vector<8x128xf32>
    %252 = arith.addf %249, %251 : vector<8x128xf32>
    %253 = vector.extract_strided_slice %207 {offsets = [16, 0], sizes = [8, 384], strides = [1, 1]} : vector<64x384xf32> to vector<8x384xf32>
    %254 = arith.truncf %252 : vector<8x128xf32> to vector<8x128xbf16>
    %cst_40 = arith.constant dense<0.000000e+00> : vector<8x384xf32>
    %255 = tpu.matmul %254, %198, %cst_40 {dimension_numbers = #tpu.dot_dimension_numbers<[1], [0], [0], [1], [0, 0, 1, 1], [], []>} : vector<8x128xbf16>, vector<128x384xbf16>, vector<8x384xf32> -> vector<8x384xf32>
    %256 = vector.extract_strided_slice %253 {offsets = [0, 0], sizes = [8, 256], strides = [1, 1]} : vector<8x384xf32> to vector<8x256xf32>
    %257 = vector.extract_strided_slice %255 {offsets = [0, 0], sizes = [8, 256], strides = [1, 1]} : vector<8x384xf32> to vector<8x256xf32>
    %258 = arith.addf %256, %257 : vector<8x256xf32>
    %259 = arith.negf %258 : vector<8x256xf32>
    %260 = math.exp %259 : vector<8x256xf32>
    %cst_41 = arith.constant 1.000000e+00 : f32
    %261 = vector.broadcast %cst_41 : f32 to vector<8x256xf32>
    %262 = arith.addf %261, %260 : vector<8x256xf32>
    %263 = arith.divf %261, %262 : vector<8x256xf32>
    %264 = vector.extract_strided_slice %263 {offsets = [0, 0], sizes = [8, 128], strides = [1, 1]} : vector<8x256xf32> to vector<8x128xf32>
    %265 = vector.extract_strided_slice %263 {offsets = [0, 128], sizes = [8, 128], strides = [1, 1]} : vector<8x256xf32> to vector<8x128xf32>
    %266 = vector.extract_strided_slice %253 {offsets = [0, 256], sizes = [8, 128], strides = [1, 1]} : vector<8x384xf32> to vector<8x128xf32>
    %267 = vector.extract_strided_slice %255 {offsets = [0, 256], sizes = [8, 128], strides = [1, 1]} : vector<8x384xf32> to vector<8x128xf32>
    %268 = arith.addf %267, %204 : vector<8x128xf32>
    %269 = arith.mulf %264, %268 : vector<8x128xf32>
    %270 = arith.addf %266, %269 : vector<8x128xf32>
    %271 = math.tanh %270 : vector<8x128xf32>
    %272 = arith.subf %252, %271 : vector<8x128xf32>
    %273 = arith.mulf %265, %272 : vector<8x128xf32>
    %274 = arith.addf %271, %273 : vector<8x128xf32>
    %275 = vector.extract_strided_slice %207 {offsets = [24, 0], sizes = [8, 384], strides = [1, 1]} : vector<64x384xf32> to vector<8x384xf32>
    %276 = arith.truncf %274 : vector<8x128xf32> to vector<8x128xbf16>
    %cst_42 = arith.constant dense<0.000000e+00> : vector<8x384xf32>
    %277 = tpu.matmul %276, %198, %cst_42 {dimension_numbers = #tpu.dot_dimension_numbers<[1], [0], [0], [1], [0, 0, 1, 1], [], []>} : vector<8x128xbf16>, vector<128x384xbf16>, vector<8x384xf32> -> vector<8x384xf32>
    %278 = vector.extract_strided_slice %275 {offsets = [0, 0], sizes = [8, 256], strides = [1, 1]} : vector<8x384xf32> to vector<8x256xf32>
    %279 = vector.extract_strided_slice %277 {offsets = [0, 0], sizes = [8, 256], strides = [1, 1]} : vector<8x384xf32> to vector<8x256xf32>
    %280 = arith.addf %278, %279 : vector<8x256xf32>
    %281 = arith.negf %280 : vector<8x256xf32>
    %282 = math.exp %281 : vector<8x256xf32>
    %cst_43 = arith.constant 1.000000e+00 : f32
    %283 = vector.broadcast %cst_43 : f32 to vector<8x256xf32>
    %284 = arith.addf %283, %282 : vector<8x256xf32>
    %285 = arith.divf %283, %284 : vector<8x256xf32>
    %286 = vector.extract_strided_slice %285 {offsets = [0, 0], sizes = [8, 128], strides = [1, 1]} : vector<8x256xf32> to vector<8x128xf32>
    %287 = vector.extract_strided_slice %285 {offsets = [0, 128], sizes = [8, 128], strides = [1, 1]} : vector<8x256xf32> to vector<8x128xf32>
    %288 = vector.extract_strided_slice %275 {offsets = [0, 256], sizes = [8, 128], strides = [1, 1]} : vector<8x384xf32> to vector<8x128xf32>
    %289 = vector.extract_strided_slice %277 {offsets = [0, 256], sizes = [8, 128], strides = [1, 1]} : vector<8x384xf32> to vector<8x128xf32>
    %290 = arith.addf %289, %204 : vector<8x128xf32>
    %291 = arith.mulf %286, %290 : vector<8x128xf32>
    %292 = arith.addf %288, %291 : vector<8x128xf32>
    %293 = math.tanh %292 : vector<8x128xf32>
    %294 = arith.subf %274, %293 : vector<8x128xf32>
    %295 = arith.mulf %287, %294 : vector<8x128xf32>
    %296 = arith.addf %293, %295 : vector<8x128xf32>
    %297 = vector.extract_strided_slice %207 {offsets = [32, 0], sizes = [8, 384], strides = [1, 1]} : vector<64x384xf32> to vector<8x384xf32>
    %298 = arith.truncf %296 : vector<8x128xf32> to vector<8x128xbf16>
    %cst_44 = arith.constant dense<0.000000e+00> : vector<8x384xf32>
    %299 = tpu.matmul %298, %198, %cst_44 {dimension_numbers = #tpu.dot_dimension_numbers<[1], [0], [0], [1], [0, 0, 1, 1], [], []>} : vector<8x128xbf16>, vector<128x384xbf16>, vector<8x384xf32> -> vector<8x384xf32>
    %300 = vector.extract_strided_slice %297 {offsets = [0, 0], sizes = [8, 256], strides = [1, 1]} : vector<8x384xf32> to vector<8x256xf32>
    %301 = vector.extract_strided_slice %299 {offsets = [0, 0], sizes = [8, 256], strides = [1, 1]} : vector<8x384xf32> to vector<8x256xf32>
    %302 = arith.addf %300, %301 : vector<8x256xf32>
    %303 = arith.negf %302 : vector<8x256xf32>
    %304 = math.exp %303 : vector<8x256xf32>
    %cst_45 = arith.constant 1.000000e+00 : f32
    %305 = vector.broadcast %cst_45 : f32 to vector<8x256xf32>
    %306 = arith.addf %305, %304 : vector<8x256xf32>
    %307 = arith.divf %305, %306 : vector<8x256xf32>
    %308 = vector.extract_strided_slice %307 {offsets = [0, 0], sizes = [8, 128], strides = [1, 1]} : vector<8x256xf32> to vector<8x128xf32>
    %309 = vector.extract_strided_slice %307 {offsets = [0, 128], sizes = [8, 128], strides = [1, 1]} : vector<8x256xf32> to vector<8x128xf32>
    %310 = vector.extract_strided_slice %297 {offsets = [0, 256], sizes = [8, 128], strides = [1, 1]} : vector<8x384xf32> to vector<8x128xf32>
    %311 = vector.extract_strided_slice %299 {offsets = [0, 256], sizes = [8, 128], strides = [1, 1]} : vector<8x384xf32> to vector<8x128xf32>
    %312 = arith.addf %311, %204 : vector<8x128xf32>
    %313 = arith.mulf %308, %312 : vector<8x128xf32>
    %314 = arith.addf %310, %313 : vector<8x128xf32>
    %315 = math.tanh %314 : vector<8x128xf32>
    %316 = arith.subf %296, %315 : vector<8x128xf32>
    %317 = arith.mulf %309, %316 : vector<8x128xf32>
    %318 = arith.addf %315, %317 : vector<8x128xf32>
    %319 = vector.extract_strided_slice %207 {offsets = [40, 0], sizes = [8, 384], strides = [1, 1]} : vector<64x384xf32> to vector<8x384xf32>
    %320 = arith.truncf %318 : vector<8x128xf32> to vector<8x128xbf16>
    %cst_46 = arith.constant dense<0.000000e+00> : vector<8x384xf32>
    %321 = tpu.matmul %320, %198, %cst_46 {dimension_numbers = #tpu.dot_dimension_numbers<[1], [0], [0], [1], [0, 0, 1, 1], [], []>} : vector<8x128xbf16>, vector<128x384xbf16>, vector<8x384xf32> -> vector<8x384xf32>
    %322 = vector.extract_strided_slice %319 {offsets = [0, 0], sizes = [8, 256], strides = [1, 1]} : vector<8x384xf32> to vector<8x256xf32>
    %323 = vector.extract_strided_slice %321 {offsets = [0, 0], sizes = [8, 256], strides = [1, 1]} : vector<8x384xf32> to vector<8x256xf32>
    %324 = arith.addf %322, %323 : vector<8x256xf32>
    %325 = arith.negf %324 : vector<8x256xf32>
    %326 = math.exp %325 : vector<8x256xf32>
    %cst_47 = arith.constant 1.000000e+00 : f32
    %327 = vector.broadcast %cst_47 : f32 to vector<8x256xf32>
    %328 = arith.addf %327, %326 : vector<8x256xf32>
    %329 = arith.divf %327, %328 : vector<8x256xf32>
    %330 = vector.extract_strided_slice %329 {offsets = [0, 0], sizes = [8, 128], strides = [1, 1]} : vector<8x256xf32> to vector<8x128xf32>
    %331 = vector.extract_strided_slice %329 {offsets = [0, 128], sizes = [8, 128], strides = [1, 1]} : vector<8x256xf32> to vector<8x128xf32>
    %332 = vector.extract_strided_slice %319 {offsets = [0, 256], sizes = [8, 128], strides = [1, 1]} : vector<8x384xf32> to vector<8x128xf32>
    %333 = vector.extract_strided_slice %321 {offsets = [0, 256], sizes = [8, 128], strides = [1, 1]} : vector<8x384xf32> to vector<8x128xf32>
    %334 = arith.addf %333, %204 : vector<8x128xf32>
    %335 = arith.mulf %330, %334 : vector<8x128xf32>
    %336 = arith.addf %332, %335 : vector<8x128xf32>
    %337 = math.tanh %336 : vector<8x128xf32>
    %338 = arith.subf %318, %337 : vector<8x128xf32>
    %339 = arith.mulf %331, %338 : vector<8x128xf32>
    %340 = arith.addf %337, %339 : vector<8x128xf32>
    %341 = vector.extract_strided_slice %207 {offsets = [48, 0], sizes = [8, 384], strides = [1, 1]} : vector<64x384xf32> to vector<8x384xf32>
    %342 = arith.truncf %340 : vector<8x128xf32> to vector<8x128xbf16>
    %cst_48 = arith.constant dense<0.000000e+00> : vector<8x384xf32>
    %343 = tpu.matmul %342, %198, %cst_48 {dimension_numbers = #tpu.dot_dimension_numbers<[1], [0], [0], [1], [0, 0, 1, 1], [], []>} : vector<8x128xbf16>, vector<128x384xbf16>, vector<8x384xf32> -> vector<8x384xf32>
    %344 = vector.extract_strided_slice %341 {offsets = [0, 0], sizes = [8, 256], strides = [1, 1]} : vector<8x384xf32> to vector<8x256xf32>
    %345 = vector.extract_strided_slice %343 {offsets = [0, 0], sizes = [8, 256], strides = [1, 1]} : vector<8x384xf32> to vector<8x256xf32>
    %346 = arith.addf %344, %345 : vector<8x256xf32>
    %347 = arith.negf %346 : vector<8x256xf32>
    %348 = math.exp %347 : vector<8x256xf32>
    %cst_49 = arith.constant 1.000000e+00 : f32
    %349 = vector.broadcast %cst_49 : f32 to vector<8x256xf32>
    %350 = arith.addf %349, %348 : vector<8x256xf32>
    %351 = arith.divf %349, %350 : vector<8x256xf32>
    %352 = vector.extract_strided_slice %351 {offsets = [0, 0], sizes = [8, 128], strides = [1, 1]} : vector<8x256xf32> to vector<8x128xf32>
    %353 = vector.extract_strided_slice %351 {offsets = [0, 128], sizes = [8, 128], strides = [1, 1]} : vector<8x256xf32> to vector<8x128xf32>
    %354 = vector.extract_strided_slice %341 {offsets = [0, 256], sizes = [8, 128], strides = [1, 1]} : vector<8x384xf32> to vector<8x128xf32>
    %355 = vector.extract_strided_slice %343 {offsets = [0, 256], sizes = [8, 128], strides = [1, 1]} : vector<8x384xf32> to vector<8x128xf32>
    %356 = arith.addf %355, %204 : vector<8x128xf32>
    %357 = arith.mulf %352, %356 : vector<8x128xf32>
    %358 = arith.addf %354, %357 : vector<8x128xf32>
    %359 = math.tanh %358 : vector<8x128xf32>
    %360 = arith.subf %340, %359 : vector<8x128xf32>
    %361 = arith.mulf %353, %360 : vector<8x128xf32>
    %362 = arith.addf %359, %361 : vector<8x128xf32>
    %363 = vector.extract_strided_slice %207 {offsets = [56, 0], sizes = [8, 384], strides = [1, 1]} : vector<64x384xf32> to vector<8x384xf32>
    %364 = arith.truncf %362 : vector<8x128xf32> to vector<8x128xbf16>
    %cst_50 = arith.constant dense<0.000000e+00> : vector<8x384xf32>
    %365 = tpu.matmul %364, %198, %cst_50 {dimension_numbers = #tpu.dot_dimension_numbers<[1], [0], [0], [1], [0, 0, 1, 1], [], []>} : vector<8x128xbf16>, vector<128x384xbf16>, vector<8x384xf32> -> vector<8x384xf32>
    %366 = vector.extract_strided_slice %363 {offsets = [0, 0], sizes = [8, 256], strides = [1, 1]} : vector<8x384xf32> to vector<8x256xf32>
    %367 = vector.extract_strided_slice %365 {offsets = [0, 0], sizes = [8, 256], strides = [1, 1]} : vector<8x384xf32> to vector<8x256xf32>
    %368 = arith.addf %366, %367 : vector<8x256xf32>
    %369 = arith.negf %368 : vector<8x256xf32>
    %370 = math.exp %369 : vector<8x256xf32>
    %cst_51 = arith.constant 1.000000e+00 : f32
    %371 = vector.broadcast %cst_51 : f32 to vector<8x256xf32>
    %372 = arith.addf %371, %370 : vector<8x256xf32>
    %373 = arith.divf %371, %372 : vector<8x256xf32>
    %374 = vector.extract_strided_slice %373 {offsets = [0, 0], sizes = [8, 128], strides = [1, 1]} : vector<8x256xf32> to vector<8x128xf32>
    %375 = vector.extract_strided_slice %373 {offsets = [0, 128], sizes = [8, 128], strides = [1, 1]} : vector<8x256xf32> to vector<8x128xf32>
    %376 = vector.extract_strided_slice %363 {offsets = [0, 256], sizes = [8, 128], strides = [1, 1]} : vector<8x384xf32> to vector<8x128xf32>
    %377 = vector.extract_strided_slice %365 {offsets = [0, 256], sizes = [8, 128], strides = [1, 1]} : vector<8x384xf32> to vector<8x128xf32>
    %378 = arith.addf %377, %204 : vector<8x128xf32>
    %379 = arith.mulf %374, %378 : vector<8x128xf32>
    %380 = arith.addf %376, %379 : vector<8x128xf32>
    %381 = math.tanh %380 : vector<8x128xf32>
    %382 = arith.subf %362, %381 : vector<8x128xf32>
    %383 = arith.mulf %375, %382 : vector<8x128xf32>
    %384 = arith.addf %381, %383 : vector<8x128xf32>
    %c4 = arith.constant 4 : index
    %c0_52 = arith.constant 0 : index
    %c0_53 = arith.constant 0 : index
    %385 = vector.load %arg1[%c4, %c0_52, %c0_53] : memref<5x128x384xbf16, #tpu.memory_space<vmem>>, vector<1x128x128xbf16>
    %386 = vector.shape_cast %385 : vector<1x128x128xbf16> to vector<128x128xbf16>
    %c2_54 = arith.constant 2 : index
    %c0_55 = arith.constant 0 : index
    %c0_56 = arith.constant 0 : index
    %387 = vector.load %arg2[%c2_54, %c0_55, %c0_56] : memref<3x8x384xf32, #tpu.memory_space<vmem>>, vector<1x8x384xf32>
    %388 = vector.shape_cast %387 : vector<1x8x384xf32> to vector<8x384xf32>
    %389 = vector.extract_strided_slice %388 {offsets = [0, 0], sizes = [1, 128], strides = [1, 1]} : vector<8x384xf32> to vector<1x128xf32>
    %390 = arith.truncf %384 : vector<8x128xf32> to vector<8x128xbf16>
    %cst_57 = arith.constant dense<0.000000e+00> : vector<8x128xf32>
    %391 = tpu.matmul %390, %386, %cst_57 {dimension_numbers = #tpu.dot_dimension_numbers<[1], [0], [0], [1], [0, 0, 1, 1], [], []>} : vector<8x128xbf16>, vector<128x128xbf16>, vector<8x128xf32> -> vector<8x128xf32>
    %392 = vector.broadcast %389 : vector<1x128xf32> to vector<8x128xf32>
    %393 = arith.addf %391, %392 : vector<8x128xf32>
    %c0_58 = arith.constant 0 : index
    %c0_59 = arith.constant 0 : index
    %394 = vector.load %arg3[%c0_58, %c0_59] : memref<8x128xf32, #tpu.memory_space<vmem>>, vector<8x128xf32>
    tpu.vector_store %arg3[%c0_58, %c0_59], %393 {strides = array<i32>} : memref<8x128xf32, #tpu.memory_space<vmem>>, vector<8x128xf32>,
    return
  }
}

</mosaic_0001>

<llo_original>
// kernel: gru_model_forward.1
$region0: #{gru_model_forward.1}
  #allocation0 [shape = 'u32[]', space=smem, size = 0x4, offset = 0x4, fixed_abs, tag = 'smem constant byte address 0x4 - core index']
  #allocation1 [shape = 'u32[72,128]{1,0:T(1,128)}', space=vmem, size = 0x9000, scoped, tag = 'internal scratch']
  %s0 = inlined_call_operand.vmem [shape: f32[8,8,128], index: 0, kind: input, shape index: {}]
  %s1 = inlined_call_operand.hbm [shape: bf16[5,128,384], index: 1, kind: input, shape index: {}]
  %s2 = inlined_call_operand.vmem [shape: f32[3,8,384], index: 2, kind: input, shape index: {}]
  %s3 = inlined_call_operand.vmem [shape: f32[8,128], index: 3, kind: output, shape index: {}]
  %s4 = sld [smem:[#allocation0]]
  $region26: #{gru_model_forward.1} parent=0
    _
  %s6 = ssub.s32 1, %s4
  %s7 = scalar_select 0, %s6, %s4
  $region1: #{gru_model_forward.1} parent=0
    #allocation2 [shape = 'u8[491520]{0}', space=vmem, size = 0x78000, scoped, tag = 'input window, operand 1, single buffered']
    #allocation3 [shape = 's32[1]{0}', space=sflag, size = 0x4, scoped, tag = 'scoped memory for gru_model_forward.1']
    %8 = vsyncpa [#allocation3], 0
    // Predicated region
    $region2: #{gru_model_forward.1} parent=1 // pred_check
      _
    $region3: #{gru_model_forward.1} parent=1 // pred_check_branch
      %10 = sbr.rel (0) target = $region5
    $region4: #{gru_model_forward.1} parent=1 // pred_region
      _
    $region5: #{gru_model_forward.1} parent=1 // pred_fallthru
      _
    // Predicated region
    $region6: #{gru_model_forward.1} parent=1 // pred_check
      _
    $region7: #{gru_model_forward.1} parent=1 // pred_check_branch
      %12 = sbr.rel (0) target = $region9
    $region8: #{gru_model_forward.1} parent=1 // pred_region
      %14 = vsyncadd [#allocation3], 0
      %s15 = sshll.u32 %s1, 4
      %s16 = int_to_ptr.hbm [resolvable:$true] %s15
      %s17 = sshll.u32 [#allocation2], 4
      %s18 = int_to_ptr.vmem [resolvable:$true] %s17
      %23 = dma.hbm_to_vmem [thread:$0]  %s16, 15360, %s18, [#allocation3], 192, 192, 12
    $region9: #{gru_model_forward.1} parent=1 // pred_fallthru
      _
    // Predicated region
    $region10: #{gru_model_forward.1} parent=1 // pred_check
      _
    $region11: #{gru_model_forward.1} parent=1 // pred_check_branch
      %25 = sbr.rel (0) target = $region13
    $region12: #{gru_model_forward.1} parent=1 // pred_region
      _
    $region13: #{gru_model_forward.1} parent=1 // pred_fallthru
      _
    // Predicated region
    $region14: #{gru_model_forward.1} parent=1 // pred_check
      _
    $region15: #{gru_model_forward.1} parent=1 // pred_check_branch
      %27 = sbr.rel (0) target = $region17
    $region16: #{gru_model_forward.1} parent=1 // pred_region
      %29 = dma.done [#allocation3], 15360
    $region17: #{gru_model_forward.1} parent=1 // pred_fallthru
      _
    %v31 = vld [vmem:[%s0] sm:$0xff]
    %v32 = vld [vmem:[%s0 + $0x8] sm:$0xff]
    %v33 = vld [vmem:[%s0 + $0x10] sm:$0xff]
    %v34 = vld [vmem:[%s0 + $0x18] sm:$0xff]
    %v35 = vld [vmem:[%s0 + $0x20] sm:$0xff]
    %v36 = vld [vmem:[%s0 + $0x28] sm:$0xff]
    %v37 = vld [vmem:[%s0 + $0x30] sm:$0xff]
    %v38 = vld [vmem:[%s0 + $0x38] sm:$0xff]
    %v39 = vpack.c.bf16 %v32, %v31
    %v40 = vpack.c.bf16 %v34, %v33
    %v41 = vpack.c.bf16 %v36, %v35
    %v42 = vpack.c.bf16 %v38, %v37
    %v43 = vld [vmem:[#allocation2] sm:$0xff]
    %v44 = vld [vmem:[#allocation2 + $0x8] sm:$0xf]
    %v45 = vld [vmem:[#allocation2 + $0xc] sm:$0xff]
    %v46 = vld [vmem:[#allocation2 + $0x14] sm:$0xf]
    %v47 = vld [vmem:[#allocation2 + $0x18] sm:$0xff]
    %v48 = vld [vmem:[#allocation2 + $0x20] sm:$0xf]
    %v49 = vld [vmem:[#allocation2 + $0x24] sm:$0xff]
    %v50 = vld [vmem:[#allocation2 + $0x2c] sm:$0xf]
    %v51 = vld [vmem:[#allocation2 + $0x30] sm:$0xff]
    %v52 = vld [vmem:[#allocation2 + $0x38] sm:$0xf]
    %v53 = vld [vmem:[#allocation2 + $0x3c] sm:$0xff]
    %v54 = vld [vmem:[#allocation2 + $0x44] sm:$0xf]
    %v55 = vld [vmem:[#allocation2 + $0x48] sm:$0xff]
    %v56 = vld [vmem:[#allocation2 + $0x50] sm:$0xf]
    %v57 = vld [vmem:[#allocation2 + $0x54] sm:$0xff]
    %v58 = vld [vmem:[#allocation2 + $0x5c] sm:$0xf]
    %v59 = vld [vmem:[#allocation2 + $0x60] sm:$0xff]
    %v60 = vld [vmem:[#allocation2 + $0x68] sm:$0xf]
    %v61 = vld [vmem:[#allocation2 + $0x6c] sm:$0xff]
    %v62 = vld [vmem:[#allocation2 + $0x74] sm:$0xf]
    %v63 = vld [vmem:[#allocation2 + $0x78] sm:$0xff]
    %v64 = vld [vmem:[#allocation2 + $0x80] sm:$0xf]
    %v65 = vld [vmem:[#allocation2 + $0x84] sm:$0xff]
    %v66 = vld [vmem:[#allocation2 + $0x8c] sm:$0xf]
    %v67 = vld [vmem:[#allocation2 + $0x90] sm:$0xff]
    %v68 = vld [vmem:[#allocation2 + $0x98] sm:$0xf]
    %v69 = vld [vmem:[#allocation2 + $0x9c] sm:$0xff]
    %v70 = vld [vmem:[#allocation2 + $0xa4] sm:$0xf]
    %v71 = vld [vmem:[#allocation2 + $0xa8] sm:$0xff]
    %v72 = vld [vmem:[#allocation2 + $0xb0] sm:$0xf]
    %v73 = vld [vmem:[#allocation2 + $0xb4] sm:$0xff]
    %v74 = vld [vmem:[#allocation2 + $0xbc] sm:$0xf]
    %s75 = scalar_lea.vmem [#allocation2], 192
    %v76 = vld [vmem:[%s75] sm:$0xff]
    %v77 = vld [vmem:[%s75 + $0x8] sm:$0xf]
    %v78 = vld [vmem:[%s75 + $0xc] sm:$0xff]
    %v79 = vld [vmem:[%s75 + $0x14] sm:$0xf]
    %v80 = vld [vmem:[%s75 + $0x18] sm:$0xff]
    %v81 = vld [vmem:[%s75 + $0x20] sm:$0xf]
    %v82 = vld [vmem:[%s75 + $0x24] sm:$0xff]
    %v83 = vld [vmem:[%s75 + $0x2c] sm:$0xf]
    %v84 = vld [vmem:[%s75 + $0x30] sm:$0xff]
    %v85 = vld [vmem:[%s75 + $0x38] sm:$0xf]
    %v86 = vld [vmem:[%s75 + $0x3c] sm:$0xff]
    %v87 = vld [vmem:[%s75 + $0x44] sm:$0xf]
    %v88 = vld [vmem:[%s75 + $0x48] sm:$0xff]
    %v89 = vld [vmem:[%s75 + $0x50] sm:$0xf]
    %v90 = vld [vmem:[%s75 + $0x54] sm:$0xff]
    %v91 = vld [vmem:[%s75 + $0x5c] sm:$0xf]
    %v92 = vld [vmem:[%s75 + $0x60] sm:$0xff]
    %v93 = vld [vmem:[%s75 + $0x68] sm:$0xf]
    %v94 = vld [vmem:[%s75 + $0x6c] sm:$0xff]
    %v95 = vld [vmem:[%s75 + $0x74] sm:$0xf]
    %v96 = vld [vmem:[%s75 + $0x78] sm:$0xff]
    %v97 = vld [vmem:[%s75 + $0x80] sm:$0xf]
    %v98 = vld [vmem:[%s75 + $0x84] sm:$0xff]
    %v99 = vld [vmem:[%s75 + $0x8c] sm:$0xf]
    %v100 = vld [vmem:[%s75 + $0x90] sm:$0xff]
    %v101 = vld [vmem:[%s75 + $0x98] sm:$0xf]
    %v102 = vld [vmem:[%s75 + $0x9c] sm:$0xff]
    %v103 = vld [vmem:[%s75 + $0xa4] sm:$0xf]
    %v104 = vld [vmem:[%s75 + $0xa8] sm:$0xff]
    %v105 = vld [vmem:[%s75 + $0xb0] sm:$0xf]
    %v106 = vld [vmem:[%s75 + $0xb4] sm:$0xff]
    %v107 = vld [vmem:[%s75 + $0xbc] sm:$0xf]
    %v108 = vld [vmem:[%s2] sm:$0xff]
    %v109 = vld [vmem:[%s2 + $0x8] sm:$0xff]
    %v110 = vld [vmem:[%s2 + $0x10] sm:$0xff]
    %v111 = vperm.slane %v108, 1
    %v112 = vperm.slane %v108, 0
    %v113 = vperm.slane %v109, 0
    %v114 = vperm.slane %v110, 0
    %v147 = vunpack.c.l.b16 %v43
    %v148 = vunpack.c.h.b16 %v43
    %v149 = vunpack.c.l.b16 %v44
    %v150 = vunpack.c.l.b16 %v45
    %v151 = vunpack.c.h.b16 %v45
    %v152 = vunpack.c.l.b16 %v46
    %v153 = vunpack.c.l.b16 %v47
    %v154 = vunpack.c.h.b16 %v47
    %v155 = vunpack.c.l.b16 %v48
    %v156 = vunpack.c.l.b16 %v49
    %v157 = vunpack.c.h.b16 %v49
    %v158 = vunpack.c.l.b16 %v50
    %v159 = vunpack.c.l.b16 %v51
    %v160 = vunpack.c.h.b16 %v51
    %v161 = vunpack.c.l.b16 %v52
    %v162 = vunpack.c.l.b16 %v53
    %v163 = vunpack.c.h.b16 %v53
    %v164 = vunpack.c.l.b16 %v54
    %v165 = vunpack.c.l.b16 %v55
    %v166 = vunpack.c.h.b16 %v55
    %v167 = vunpack.c.l.b16 %v56
    %v168 = vunpack.c.l.b16 %v57
    %v169 = vunpack.c.h.b16 %v57
    %v170 = vunpack.c.l.b16 %v58
    %v171 = vunpack.c.l.b16 %v59
    %v172 = vunpack.c.h.b16 %v59
    %v173 = vunpack.c.l.b16 %v60
    %v174 = vunpack.c.l.b16 %v61
    %v175 = vunpack.c.h.b16 %v61
    %v176 = vunpack.c.l.b16 %v62
    %v177 = vunpack.c.l.b16 %v63
    %v178 = vunpack.c.h.b16 %v63
    %v179 = vunpack.c.l.b16 %v64
    %v180 = vunpack.c.l.b16 %v65
    %v181 = vunpack.c.h.b16 %v65
    %v182 = vunpack.c.l.b16 %v66
    %v183 = vunpack.c.l.b16 %v67
    %v184 = vunpack.c.h.b16 %v67
    %v185 = vunpack.c.l.b16 %v68
    %v186 = vunpack.c.l.b16 %v69
    %v187 = vunpack.c.h.b16 %v69
    %v188 = vunpack.c.l.b16 %v70
    %v189 = vunpack.c.l.b16 %v71
    %v190 = vunpack.c.h.b16 %v71
    %v191 = vunpack.c.l.b16 %v72
    %v192 = vunpack.c.l.b16 %v73
    %v193 = vunpack.c.h.b16 %v73
    %v194 = vunpack.c.l.b16 %v74
    %v195 = vpack.c.b16 %v150, %v147
    %v196 = vpack.c.b16 %v151, %v148
    %v197 = vpack.c.b16 %v152, %v149
    %v198 = vpack.c.b16 %v156, %v153
    %v199 = vpack.c.b16 %v157, %v154
    %v200 = vpack.c.b16 %v158, %v155
    %v201 = vpack.c.b16 %v162, %v159
    %v202 = vpack.c.b16 %v163, %v160
    %v203 = vpack.c.b16 %v164, %v161
    %v204 = vpack.c.b16 %v168, %v165
    %v205 = vpack.c.b16 %v169, %v166
    %v206 = vpack.c.b16 %v170, %v167
    %v207 = vpack.c.b16 %v174, %v171
    %v208 = vpack.c.b16 %v175, %v172
    %v209 = vpack.c.b16 %v176, %v173
    %v210 = vpack.c.b16 %v180, %v177
    %v211 = vpack.c.b16 %v181, %v178
    %v212 = vpack.c.b16 %v182, %v179
    %v213 = vpack.c.b16 %v186, %v183
    %v214 = vpack.c.b16 %v187, %v184
    %v215 = vpack.c.b16 %v188, %v185
    %v216 = vpack.c.b16 %v192, %v189
    %v217 = vpack.c.b16 %v193, %v190
    %v218 = vpack.c.b16 %v194, %v191
    %243 = vmatpush.bf16.msra.mxu0 %v216
    %244 = vmatpush.bf16.msra.mxu0 %v213
    %245 = vmatpush.bf16.msra.mxu0 %v210
    %246 = vmatpush.bf16.msra.mxu0 %v207
    %247 = vmatpush.bf16.msra.mxu0 %v204
    %248 = vmatpush.bf16.msra.mxu0 %v201
    %249 = vmatpush.bf16.msra.mxu0 %v198
    %250 = vmatpush.bf16.msra.mxu0 %v195
    %251 = vmatmul.bf16.gmra.mxu0 %v39
    %v252 = vpop.f32.mrf.mxu0
    %v253 = vadd.f32 %v112, %v252
    %v254 = vpop.f32.mrf.mxu0
    %v255 = vadd.f32 %v112, %v254
    %256 = vmatmul.bf16.gmra.mxu0 %v40
    %v257 = vpop.f32.mrf.mxu0
    %v258 = vadd.f32 %v112, %v257
    %v259 = vpop.f32.mrf.mxu0
    %v260 = vadd.f32 %v112, %v259
    %261 = vmatmul.bf16.gmra.mxu0 %v41
    %v262 = vpop.f32.mrf.mxu0
    %v263 = vadd.f32 %v112, %v262
    %v264 = vpop.f32.mrf.mxu0
    %v265 = vadd.f32 %v112, %v264
    %266 = vmatmul.bf16.gmra.mxu0 %v42
    %v267 = vpop.f32.mrf.mxu0
    %v268 = vadd.f32 %v112, %v267
    %v269 = vpop.f32.mrf.mxu0
    %v270 = vadd.f32 %v112, %v269
    %271 = vdwg.mxu0
    %272 = vmatpush.bf16.msra.mxu0 %v217
    %273 = vmatpush.bf16.msra.mxu0 %v214
    %274 = vmatpush.bf16.msra.mxu0 %v211
    %275 = vmatpush.bf16.msra.mxu0 %v208
    %276 = vmatpush.bf16.msra.mxu0 %v205
    %277 = vmatpush.bf16.msra.mxu0 %v202
    %278 = vmatpush.bf16.msra.mxu0 %v199
    %279 = vmatpush.bf16.msra.mxu0 %v196
    %280 = vmatmul.bf16.gmra.mxu0 %v39
    %v281 = vpop.f32.mrf.mxu0
    %v282 = vadd.f32 %v113, %v281
    %v283 = vpop.f32.mrf.mxu0
    %v284 = vadd.f32 %v113, %v283
    %285 = vmatmul.bf16.gmra.mxu0 %v40
    %v286 = vpop.f32.mrf.mxu0
    %v287 = vadd.f32 %v113, %v286
    %v288 = vpop.f32.mrf.mxu0
    %v289 = vadd.f32 %v113, %v288
    %290 = vmatmul.bf16.gmra.mxu0 %v41
    %v291 = vpop.f32.mrf.mxu0
    %v292 = vadd.f32 %v113, %v291
    %v293 = vpop.f32.mrf.mxu0
    %v294 = vadd.f32 %v113, %v293
    %295 = vmatmul.bf16.gmra.mxu0 %v42
    %v296 = vpop.f32.mrf.mxu0
    %v297 = vadd.f32 %v113, %v296
    %v298 = vpop.f32.mrf.mxu0
    %v299 = vadd.f32 %v113, %v298
    %300 = vdwg.mxu0
    %301 = vmatpush.bf16.msra.mxu0 %v218
    %302 = vmatpush.bf16.msra.mxu0 %v215
    %303 = vmatpush.bf16.msra.mxu0 %v212
    %304 = vmatpush.bf16.msra.mxu0 %v209
    %305 = vmatpush.bf16.msra.mxu0 %v206
    %306 = vmatpush.bf16.msra.mxu0 %v203
    %307 = vmatpush.bf16.msra.mxu0 %v200
    %308 = vmatpush.bf16.msra.mxu0 %v197
    %309 = vmatmul.bf16.gmra.mxu0 %v39
    %v310 = vpop.f32.mrf.mxu0
    %v311 = vadd.f32 %v114, %v310
    %v312 = vpop.f32.mrf.mxu0
    %v313 = vadd.f32 %v114, %v312
    %314 = vmatmul.bf16.gmra.mxu0 %v40
    %v315 = vpop.f32.mrf.mxu0
    %v316 = vadd.f32 %v114, %v315
    %v317 = vpop.f32.mrf.mxu0
    %v318 = vadd.f32 %v114, %v317
    %319 = vmatmul.bf16.gmra.mxu0 %v41
    %v320 = vpop.f32.mrf.mxu0
    %v321 = vadd.f32 %v114, %v320
    %v322 = vpop.f32.mrf.mxu0
    %v323 = vadd.f32 %v114, %v322
    %324 = vmatmul.bf16.gmra.mxu0 %v42
    %v325 = vpop.f32.mrf.mxu0
    %v326 = vadd.f32 %v114, %v325
    %v327 = vpop.f32.mrf.mxu0
    %v328 = vadd.f32 %v114, %v327
    %329 = vdwg.mxu0
    %v362 = vunpack.c.l.b16 %v76
    %v363 = vunpack.c.h.b16 %v76
    %v364 = vunpack.c.l.b16 %v77
    %v365 = vunpack.c.l.b16 %v78
    %v366 = vunpack.c.h.b16 %v78
    %v367 = vunpack.c.l.b16 %v79
    %v368 = vunpack.c.l.b16 %v80
    %v369 = vunpack.c.h.b16 %v80
    %v370 = vunpack.c.l.b16 %v81
    %v371 = vunpack.c.l.b16 %v82
    %v372 = vunpack.c.h.b16 %v82
    %v373 = vunpack.c.l.b16 %v83
    %v374 = vunpack.c.l.b16 %v84
    %v375 = vunpack.c.h.b16 %v84
    %v376 = vunpack.c.l.b16 %v85
    %v377 = vunpack.c.l.b16 %v86
    %v378 = vunpack.c.h.b16 %v86
    %v379 = vunpack.c.l.b16 %v87
    %v380 = vunpack.c.l.b16 %v88
    %v381 = vunpack.c.h.b16 %v88
    %v382 = vunpack.c.l.b16 %v89
    %v383 = vunpack.c.l.b16 %v90
    %v384 = vunpack.c.h.b16 %v90
    %v385 = vunpack.c.l.b16 %v91
    %v386 = vunpack.c.l.b16 %v92
    %v387 = vunpack.c.h.b16 %v92
    %v388 = vunpack.c.l.b16 %v93
    %v389 = vunpack.c.l.b16 %v94
    %v390 = vunpack.c.h.b16 %v94
    %v391 = vunpack.c.l.b16 %v95
    %v392 = vunpack.c.l.b16 %v96
    %v393 = vunpack.c.h.b16 %v96
    %v394 = vunpack.c.l.b16 %v97
    %v395 = vunpack.c.l.b16 %v98
    %v396 = vunpack.c.h.b16 %v98
    %v397 = vunpack.c.l.b16 %v99
    %v398 = vunpack.c.l.b16 %v100
    %v399 = vunpack.c.h.b16 %v100
    %v400 = vunpack.c.l.b16 %v101
    %v401 = vunpack.c.l.b16 %v102
    %v402 = vunpack.c.h.b16 %v102
    %v403 = vunpack.c.l.b16 %v103
    %v404 = vunpack.c.l.b16 %v104
    %v405 = vunpack.c.h.b16 %v104
    %v406 = vunpack.c.l.b16 %v105
    %v407 = vunpack.c.l.b16 %v106
    %v408 = vunpack.c.h.b16 %v106
    %v409 = vunpack.c.l.b16 %v107
    %v410 = vpack.c.b16 %v365, %v362
    %v411 = vpack.c.b16 %v366, %v363
    %v412 = vpack.c.b16 %v367, %v364
    %v413 = vpack.c.b16 %v371, %v368
    %v414 = vpack.c.b16 %v372, %v369
    %v415 = vpack.c.b16 %v373, %v370
    %v416 = vpack.c.b16 %v377, %v374
    %v417 = vpack.c.b16 %v378, %v375
    %v418 = vpack.c.b16 %v379, %v376
    %v419 = vpack.c.b16 %v383, %v380
    %v420 = vpack.c.b16 %v384, %v381
    %v421 = vpack.c.b16 %v385, %v382
    %v422 = vpack.c.b16 %v389, %v386
    %v423 = vpack.c.b16 %v390, %v387
    %v424 = vpack.c.b16 %v391, %v388
    %v425 = vpack.c.b16 %v395, %v392
    %v426 = vpack.c.b16 %v396, %v393
    %v427 = vpack.c.b16 %v397, %v394
    %v428 = vpack.c.b16 %v401, %v398
    %v429 = vpack.c.b16 %v402, %v399
    %v430 = vpack.c.b16 %v403, %v400
    %v431 = vpack.c.b16 %v407, %v404
    %v432 = vpack.c.b16 %v408, %v405
    %v433 = vpack.c.b16 %v409, %v406
    %458 = vmatpush.bf16.msra.mxu0 %v431
    %459 = vmatpush.bf16.msra.mxu0 %v428
    %460 = vmatpush.bf16.msra.mxu0 %v425
    %461 = vmatpush.bf16.msra.mxu0 %v422
    %462 = vmatpush.bf16.msra.mxu0 %v419
    %463 = vmatpush.bf16.msra.mxu0 %v416
    %464 = vmatpush.bf16.msra.mxu0 %v413
    %465 = vmatpush.bf16.msra.mxu0 %v410
    %466 = vmatmul.bf16.gmra.mxu0 0
    %v467 = vpop.f32.mrf.mxu0
    %v468 = vadd.f32 0.0, %v467
    %v469 = vpop.f32.mrf.mxu0
    %470 = vdwg.mxu0
    %471 = vmatpush.bf16.msra.mxu0 %v432
    %472 = vmatpush.bf16.msra.mxu0 %v429
    %473 = vmatpush.bf16.msra.mxu0 %v426
    %474 = vmatpush.bf16.msra.mxu0 %v423
    %475 = vmatpush.bf16.msra.mxu0 %v420
    %476 = vmatpush.bf16.msra.mxu0 %v417
    %477 = vmatpush.bf16.msra.mxu0 %v414
    %478 = vmatpush.bf16.msra.mxu0 %v411
    %479 = vmatmul.bf16.gmra.mxu0 0
    %v480 = vpop.f32.mrf.mxu0
    %v481 = vadd.f32 0.0, %v480
    %v482 = vpop.f32.mrf.mxu0
    %483 = vdwg.mxu0
    %484 = vmatpush.bf16.msra.mxu0 %v433
    %485 = vmatpush.bf16.msra.mxu0 %v430
    %486 = vmatpush.bf16.msra.mxu0 %v427
    %487 = vmatpush.bf16.msra.mxu0 %v424
    %488 = vmatpush.bf16.msra.mxu0 %v421
    %489 = vmatpush.bf16.msra.mxu0 %v418
    %490 = vmatpush.bf16.msra.mxu0 %v415
    %491 = vmatpush.bf16.msra.mxu0 %v412
    %492 = vmatmul.bf16.gmra.mxu0 0
    %v493 = vpop.f32.mrf.mxu0
    %v494 = vadd.f32 0.0, %v493
    %v495 = vpop.f32.mrf.mxu0
    %496 = vdwg.mxu0
    %v497 = vadd.f32 %v253, %v468
    %v498 = vadd.f32 %v282, %v481
    %v499 = vxor.u32 %v497, 2147483648
    %v500 = vxor.u32 %v498, 2147483648
    %v501 = vmul.f32 %v499, 1.442695
    %v502 = vpow.pop %v501
    %v503 = vmul.f32 %v500, 1.442695
    %v504 = vpow.pop %v503
    %v505 = vadd.f32 %v502, 1.0
    %v506 = vadd.f32 %v504, 1.0
    %v507 = vrcp.pop %v505
    %v508 = vmul.f32 %v505, %v507
    %v509 = vsub.f32 1.0, %v508
    %v510 = vmul.f32 %v507, %v509
    %v511 = vadd.f32 %v507, %v510
    %vm512 = vweird.f32 %v505
    %vm513 = vweird.f32 %v507
    %vm514 = vmor %vm512, %vm513
    %v515 = vsel %vm514, %v507, %v511
    %v516 = vand.u32 2147483647, %v505
    %vm517 = vcmp.eq.f32.partialorder %v516, 8.507059e+37
    %v518 = vand.u32 %v505, 2147483648
    %v519 = vor.u32 1.1754944e-38, %v518
    %v520 = vsel %vm517, %v519, %v515
    %v521 = vmul.f32 1.0, %v520
    %v522 = vrcp.pop %v506
    %v523 = vmul.f32 %v506, %v522
    %v524 = vsub.f32 1.0, %v523
    %v525 = vmul.f32 %v522, %v524
    %v526 = vadd.f32 %v522, %v525
    %vm527 = vweird.f32 %v506
    %vm528 = vweird.f32 %v522
    %vm529 = vmor %vm527, %vm528
    %v530 = vsel %vm529, %v522, %v526
    %v531 = vand.u32 2147483647, %v506
    %vm532 = vcmp.eq.f32.partialorder %v531, 8.507059e+37
    %v533 = vand.u32 %v506, 2147483648
    %v534 = vor.u32 1.1754944e-38, %v533
    %v535 = vsel %vm532, %v534, %v530
    %v536 = vmul.f32 1.0, %v535
    %v537 = vadd.f32 %v494, %v111
    %v538 = vmul.f32 %v521, %v537
    %v539 = vadd.f32 %v311, %v538
    %v540 = vtanh.pop %v539
    %v541 = vsub.f32 0.0, %v540
    %v542 = vmul.f32 %v536, %v541
    %v543 = vadd.f32 %v540, %v542
    %v544 = vpack.c.bf16 %v543, %v543
    %545 = vmatpush.bf16.msra.mxu0 %v431
    %546 = vmatpush.bf16.msra.mxu0 %v428
    %547 = vmatpush.bf16.msra.mxu0 %v425
    %548 = vmatpush.bf16.msra.mxu0 %v422
    %549 = vmatpush.bf16.msra.mxu0 %v419
    %550 = vmatpush.bf16.msra.mxu0 %v416
    %551 = vmatpush.bf16.msra.mxu0 %v413
    %552 = vmatpush.bf16.msra.mxu0 %v410
    %553 = vmatmul.bf16.gmra.mxu0 %v544
    %v554 = vpop.f32.mrf.mxu0
    %v555 = vadd.f32 0.0, %v554
    %v556 = vpop.f32.mrf.mxu0
    %557 = vdwg.mxu0
    %558 = vmatpush.bf16.msra.mxu0 %v432
    %559 = vmatpush.bf16.msra.mxu0 %v429
    %560 = vmatpush.bf16.msra.mxu0 %v426
    %561 = vmatpush.bf16.msra.mxu0 %v423
    %562 = vmatpush.bf16.msra.mxu0 %v420
    %563 = vmatpush.bf16.msra.mxu0 %v417
    %564 = vmatpush.bf16.msra.mxu0 %v414
    %565 = vmatpush.bf16.msra.mxu0 %v411
    %566 = vmatmul.bf16.gmra.mxu0 %v544
    %v567 = vpop.f32.mrf.mxu0
    %v568 = vadd.f32 0.0, %v567
    %v569 = vpop.f32.mrf.mxu0
    %570 = vdwg.mxu0
    %571 = vmatpush.bf16.msra.mxu0 %v433
    %572 = vmatpush.bf16.msra.mxu0 %v430
    %573 = vmatpush.bf16.msra.mxu0 %v427
    %574 = vmatpush.bf16.msra.mxu0 %v424
    %575 = vmatpush.bf16.msra.mxu0 %v421
    %576 = vmatpush.bf16.msra.mxu0 %v418
    %577 = vmatpush.bf16.msra.mxu0 %v415
    %578 = vmatpush.bf16.msra.mxu0 %v412
    %579 = vmatmul.bf16.gmra.mxu0 %v544
    %v580 = vpop.f32.mrf.mxu0
    %v581 = vadd.f32 0.0, %v580
    %v582 = vpop.f32.mrf.mxu0
    %583 = vdwg.mxu0
    %v584 = vadd.f32 %v255, %v555
    %v585 = vadd.f32 %v284, %v568
    %v586 = vxor.u32 %v584, 2147483648
    %v587 = vxor.u32 %v585, 2147483648
    %v588 = vmul.f32 %v586, 1.442695
    %v589 = vpow.pop %v588
    %v590 = vmul.f32 %v587, 1.442695
    %v591 = vpow.pop %v590
    %v592 = vadd.f32 %v589, 1.0
    %v593 = vadd.f32 %v591, 1.0
    %v594 = vrcp.pop %v592
    %v595 = vmul.f32 %v592, %v594
    %v596 = vsub.f32 1.0, %v595
    %v597 = vmul.f32 %v594, %v596
    %v598 = vadd.f32 %v594, %v597
    %vm599 = vweird.f32 %v592
    %vm600 = vweird.f32 %v594
    %vm601 = vmor %vm599, %vm600
    %v602 = vsel %vm601, %v594, %v598
    %v603 = vand.u32 2147483647, %v592
    %vm604 = vcmp.eq.f32.partialorder %v603, 8.507059e+37
    %v605 = vand.u32 %v592, 2147483648
    %v606 = vor.u32 1.1754944e-38, %v605
    %v607 = vsel %vm604, %v606, %v602
    %v608 = vmul.f32 1.0, %v607
    %v609 = vrcp.pop %v593
    %v610 = vmul.f32 %v593, %v609
    %v611 = vsub.f32 1.0, %v610
    %v612 = vmul.f32 %v609, %v611
    %v613 = vadd.f32 %v609, %v612
    %vm614 = vweird.f32 %v593
    %vm615 = vweird.f32 %v609
    %vm616 = vmor %vm614, %vm615
    %v617 = vsel %vm616, %v609, %v613
    %v618 = vand.u32 2147483647, %v593
    %vm619 = vcmp.eq.f32.partialorder %v618, 8.507059e+37
    %v620 = vand.u32 %v593, 2147483648
    %v621 = vor.u32 1.1754944e-38, %v620
    %v622 = vsel %vm619, %v621, %v617
    %v623 = vmul.f32 1.0, %v622
    %v624 = vadd.f32 %v581, %v111
    %v625 = vmul.f32 %v608, %v624
    %v626 = vadd.f32 %v313, %v625
    %v627 = vtanh.pop %v626
    %v628 = vsub.f32 %v543, %v627
    %v629 = vmul.f32 %v623, %v628
    %v630 = vadd.f32 %v627, %v629
    %v631 = vpack.c.bf16 %v630, %v630
    %632 = vmatpush.bf16.msra.mxu0 %v431
    %633 = vmatpush.bf16.msra.mxu0 %v428
    %634 = vmatpush.bf16.msra.mxu0 %v425
    %635 = vmatpush.bf16.msra.mxu0 %v422
    %636 = vmatpush.bf16.msra.mxu0 %v419
    %637 = vmatpush.bf16.msra.mxu0 %v416
    %638 = vmatpush.bf16.msra.mxu0 %v413
    %639 = vmatpush.bf16.msra.mxu0 %v410
    %640 = vmatmul.bf16.gmra.mxu0 %v631
    %v641 = vpop.f32.mrf.mxu0
    %v642 = vadd.f32 0.0, %v641
    %v643 = vpop.f32.mrf.mxu0
    %644 = vdwg.mxu0
    %645 = vmatpush.bf16.msra.mxu0 %v432
    %646 = vmatpush.bf16.msra.mxu0 %v429
    %647 = vmatpush.bf16.msra.mxu0 %v426
    %648 = vmatpush.bf16.msra.mxu0 %v423
    %649 = vmatpush.bf16.msra.mxu0 %v420
    %650 = vmatpush.bf16.msra.mxu0 %v417
    %651 = vmatpush.bf16.msra.mxu0 %v414
    %652 = vmatpush.bf16.msra.mxu0 %v411
    %653 = vmatmul.bf16.gmra.mxu0 %v631
    %v654 = vpop.f32.mrf.mxu0
    %v655 = vadd.f32 0.0, %v654
    %v656 = vpop.f32.mrf.mxu0
    %657 = vdwg.mxu0
    %658 = vmatpush.bf16.msra.mxu0 %v433
    %659 = vmatpush.bf16.msra.mxu0 %v430
    %660 = vmatpush.bf16.msra.mxu0 %v427
    %661 = vmatpush.bf16.msra.mxu0 %v424
    %662 = vmatpush.bf16.msra.mxu0 %v421
    %663 = vmatpush.bf16.msra.mxu0 %v418
    %664 = vmatpush.bf16.msra.mxu0 %v415
    %665 = vmatpush.bf16.msra.mxu0 %v412
    %666 = vmatmul.bf16.gmra.mxu0 %v631
    %v667 = vpop.f32.mrf.mxu0
    %v668 = vadd.f32 0.0, %v667
    %v669 = vpop.f32.mrf.mxu0
    %670 = vdwg.mxu0
    %v671 = vadd.f32 %v258, %v642
    %v672 = vadd.f32 %v287, %v655
    %v673 = vxor.u32 %v671, 2147483648
    %v674 = vxor.u32 %v672, 2147483648
    %v675 = vmul.f32 %v673, 1.442695
    %v676 = vpow.pop %v675
    %v677 = vmul.f32 %v674, 1.442695
    %v678 = vpow.pop %v677
    %v679 = vadd.f32 %v676, 1.0
    %v680 = vadd.f32 %v678, 1.0
    %v681 = vrcp.pop %v679
    %v682 = vmul.f32 %v679, %v681
    %v683 = vsub.f32 1.0, %v682
    %v684 = vmul.f32 %v681, %v683
    %v685 = vadd.f32 %v681, %v684
    %vm686 = vweird.f32 %v679
    %vm687 = vweird.f32 %v681
    %vm688 = vmor %vm686, %vm687
    %v689 = vsel %vm688, %v681, %v685
    %v690 = vand.u32 2147483647, %v679
    %vm691 = vcmp.eq.f32.partialorder %v690, 8.507059e+37
    %v692 = vand.u32 %v679, 2147483648
    %v693 = vor.u32 1.1754944e-38, %v692
    %v694 = vsel %vm691, %v693, %v689
    %v695 = vmul.f32 1.0, %v694
    %v696 = vrcp.pop %v680
    %v697 = vmul.f32 %v680, %v696
    %v698 = vsub.f32 1.0, %v697
    %v699 = vmul.f32 %v696, %v698
    %v700 = vadd.f32 %v696, %v699
    %vm701 = vweird.f32 %v680
    %vm702 = vweird.f32 %v696
    %vm703 = vmor %vm701, %vm702
    %v704 = vsel %vm703, %v696, %v700
    %v705 = vand.u32 2147483647, %v680
    %vm706 = vcmp.eq.f32.partialorder %v705, 8.507059e+37
    %v707 = vand.u32 %v680, 2147483648
    %v708 = vor.u32 1.1754944e-38, %v707
    %v709 = vsel %vm706, %v708, %v704
    %v710 = vmul.f32 1.0, %v709
    %v711 = vadd.f32 %v668, %v111
    %v712 = vmul.f32 %v695, %v711
    %v713 = vadd.f32 %v316, %v712
    %v714 = vtanh.pop %v713
    %v715 = vsub.f32 %v630, %v714
    %v716 = vmul.f32 %v710, %v715
    %v717 = vadd.f32 %v714, %v716
    %v718 = vpack.c.bf16 %v717, %v717
    %719 = vmatpush.bf16.msra.mxu0 %v431
    %720 = vmatpush.bf16.msra.mxu0 %v428
    %721 = vmatpush.bf16.msra.mxu0 %v425
    %722 = vmatpush.bf16.msra.mxu0 %v422
    %723 = vmatpush.bf16.msra.mxu0 %v419
    %724 = vmatpush.bf16.msra.mxu0 %v416
    %725 = vmatpush.bf16.msra.mxu0 %v413
    %726 = vmatpush.bf16.msra.mxu0 %v410
    %727 = vmatmul.bf16.gmra.mxu0 %v718
    %v728 = vpop.f32.mrf.mxu0
    %v729 = vadd.f32 0.0, %v728
    %v730 = vpop.f32.mrf.mxu0
    %731 = vdwg.mxu0
    %732 = vmatpush.bf16.msra.mxu0 %v432
    %733 = vmatpush.bf16.msra.mxu0 %v429
    %734 = vmatpush.bf16.msra.mxu0 %v426
    %735 = vmatpush.bf16.msra.mxu0 %v423
    %736 = vmatpush.bf16.msra.mxu0 %v420
    %737 = vmatpush.bf16.msra.mxu0 %v417
    %738 = vmatpush.bf16.msra.mxu0 %v414
    %739 = vmatpush.bf16.msra.mxu0 %v411
    %740 = vmatmul.bf16.gmra.mxu0 %v718
    %v741 = vpop.f32.mrf.mxu0
    %v742 = vadd.f32 0.0, %v741
    %v743 = vpop.f32.mrf.mxu0
    %744 = vdwg.mxu0
    %745 = vmatpush.bf16.msra.mxu0 %v433
    %746 = vmatpush.bf16.msra.mxu0 %v430
    %747 = vmatpush.bf16.msra.mxu0 %v427
    %748 = vmatpush.bf16.msra.mxu0 %v424
    %749 = vmatpush.bf16.msra.mxu0 %v421
    %750 = vmatpush.bf16.msra.mxu0 %v418
    %751 = vmatpush.bf16.msra.mxu0 %v415
    %752 = vmatpush.bf16.msra.mxu0 %v412
    %753 = vmatmul.bf16.gmra.mxu0 %v718
    %v754 = vpop.f32.mrf.mxu0
    %v755 = vadd.f32 0.0, %v754
    %v756 = vpop.f32.mrf.mxu0
    %757 = vdwg.mxu0
    %v758 = vadd.f32 %v260, %v729
    %v759 = vadd.f32 %v289, %v742
    %v760 = vxor.u32 %v758, 2147483648
    %v761 = vxor.u32 %v759, 2147483648
    %v762 = vmul.f32 %v760, 1.442695
    %v763 = vpow.pop %v762
    %v764 = vmul.f32 %v761, 1.442695
    %v765 = vpow.pop %v764
    %v766 = vadd.f32 %v763, 1.0
    %v767 = vadd.f32 %v765, 1.0
    %v768 = vrcp.pop %v766
    %v769 = vmul.f32 %v766, %v768
    %v770 = vsub.f32 1.0, %v769
    %v771 = vmul.f32 %v768, %v770
    %v772 = vadd.f32 %v768, %v771
    %vm773 = vweird.f32 %v766
    %vm774 = vweird.f32 %v768
    %vm775 = vmor %vm773, %vm774
    %v776 = vsel %vm775, %v768, %v772
    %v777 = vand.u32 2147483647, %v766
    %vm778 = vcmp.eq.f32.partialorder %v777, 8.507059e+37
    %v779 = vand.u32 %v766, 2147483648
    %v780 = vor.u32 1.1754944e-38, %v779
    %v781 = vsel %vm778, %v780, %v776
    %v782 = vmul.f32 1.0, %v781
    %v783 = vrcp.pop %v767
    %v784 = vmul.f32 %v767, %v783
    %v785 = vsub.f32 1.0, %v784
    %v786 = vmul.f32 %v783, %v785
    %v787 = vadd.f32 %v783, %v786
    %vm788 = vweird.f32 %v767
    %vm789 = vweird.f32 %v783
    %vm790 = vmor %vm788, %vm789
    %v791 = vsel %vm790, %v783, %v787
    %v792 = vand.u32 2147483647, %v767
    %vm793 = vcmp.eq.f32.partialorder %v792, 8.507059e+37
    %v794 = vand.u32 %v767, 2147483648
    %v795 = vor.u32 1.1754944e-38, %v794
    %v796 = vsel %vm793, %v795, %v791
    %v797 = vmul.f32 1.0, %v796
    %v798 = vadd.f32 %v755, %v111
    %v799 = vmul.f32 %v782, %v798
    %v800 = vadd.f32 %v318, %v799
    %v801 = vtanh.pop %v800
    %v802 = vsub.f32 %v717, %v801
    %v803 = vmul.f32 %v797, %v802
    %v804 = vadd.f32 %v801, %v803
    %v805 = vpack.c.bf16 %v804, %v804
    %806 = vmatpush.bf16.msra.mxu0 %v431
    %807 = vmatpush.bf16.msra.mxu0 %v428
    %808 = vmatpush.bf16.msra.mxu0 %v425
    %809 = vmatpush.bf16.msra.mxu0 %v422
    %810 = vmatpush.bf16.msra.mxu0 %v419
    %811 = vmatpush.bf16.msra.mxu0 %v416
    %812 = vmatpush.bf16.msra.mxu0 %v413
    %813 = vmatpush.bf16.msra.mxu0 %v410
    %814 = vmatmul.bf16.gmra.mxu0 %v805
    %v815 = vpop.f32.mrf.mxu0
    %v816 = vadd.f32 0.0, %v815
    %v817 = vpop.f32.mrf.mxu0
    %818 = vdwg.mxu0
    %819 = vmatpush.bf16.msra.mxu0 %v432
    %820 = vmatpush.bf16.msra.mxu0 %v429
    %821 = vmatpush.bf16.msra.mxu0 %v426
    %822 = vmatpush.bf16.msra.mxu0 %v423
    %823 = vmatpush.bf16.msra.mxu0 %v420
    %824 = vmatpush.bf16.msra.mxu0 %v417
    %825 = vmatpush.bf16.msra.mxu0 %v414
    %826 = vmatpush.bf16.msra.mxu0 %v411
    %827 = vmatmul.bf16.gmra.mxu0 %v805
    %v828 = vpop.f32.mrf.mxu0
    %v829 = vadd.f32 0.0, %v828
    %v830 = vpop.f32.mrf.mxu0
    %831 = vdwg.mxu0
    %832 = vmatpush.bf16.msra.mxu0 %v433
    %833 = vmatpush.bf16.msra.mxu0 %v430
    %834 = vmatpush.bf16.msra.mxu0 %v427
    %835 = vmatpush.bf16.msra.mxu0 %v424
    %836 = vmatpush.bf16.msra.mxu0 %v421
    %837 = vmatpush.bf16.msra.mxu0 %v418
    %838 = vmatpush.bf16.msra.mxu0 %v415
    %839 = vmatpush.bf16.msra.mxu0 %v412
    %840 = vmatmul.bf16.gmra.mxu0 %v805
    %v841 = vpop.f32.mrf.mxu0
    %v842 = vadd.f32 0.0, %v841
    %v843 = vpop.f32.mrf.mxu0
    %844 = vdwg.mxu0
    %v845 = vadd.f32 %v263, %v816
    %v846 = vadd.f32 %v292, %v829
    %v847 = vxor.u32 %v845, 2147483648
    %v848 = vxor.u32 %v846, 2147483648
    %v849 = vmul.f32 %v847, 1.442695
    %v850 = vpow.pop %v849
    %v851 = vmul.f32 %v848, 1.442695
    %v852 = vpow.pop %v851
    %v853 = vadd.f32 %v850, 1.0
    %v854 = vadd.f32 %v852, 1.0
    %v855 = vrcp.pop %v853
    %v856 = vmul.f32 %v853, %v855
    %v857 = vsub.f32 1.0, %v856
    %v858 = vmul.f32 %v855, %v857
    %v859 = vadd.f32 %v855, %v858
    %vm860 = vweird.f32 %v853
    %vm861 = vweird.f32 %v855
    %vm862 = vmor %vm860, %vm861
    %v863 = vsel %vm862, %v855, %v859
    %v864 = vand.u32 2147483647, %v853
    %vm865 = vcmp.eq.f32.partialorder %v864, 8.507059e+37
    %v866 = vand.u32 %v853, 2147483648
    %v867 = vor.u32 1.1754944e-38, %v866
    %v868 = vsel %vm865, %v867, %v863
    %v869 = vmul.f32 1.0, %v868
    %v870 = vrcp.pop %v854
    %v871 = vmul.f32 %v854, %v870
    %v872 = vsub.f32 1.0, %v871
    %v873 = vmul.f32 %v870, %v872
    %v874 = vadd.f32 %v870, %v873
    %vm875 = vweird.f32 %v854
    %vm876 = vweird.f32 %v870
    %vm877 = vmor %vm875, %vm876
    %v878 = vsel %vm877, %v870, %v874
    %v879 = vand.u32 2147483647, %v854
    %vm880 = vcmp.eq.f32.partialorder %v879, 8.507059e+37
    %v881 = vand.u32 %v854, 2147483648
    %v882 = vor.u32 1.1754944e-38, %v881
    %v883 = vsel %vm880, %v882, %v878
    %v884 = vmul.f32 1.0, %v883
    %v885 = vadd.f32 %v842, %v111
    %v886 = vmul.f32 %v869, %v885
    %v887 = vadd.f32 %v321, %v886
    %v888 = vtanh.pop %v887
    %v889 = vsub.f32 %v804, %v888
    %v890 = vmul.f32 %v884, %v889
    %v891 = vadd.f32 %v888, %v890
    %v892 = vpack.c.bf16 %v891, %v891
    %893 = vmatpush.bf16.msra.mxu0 %v431
    %894 = vmatpush.bf16.msra.mxu0 %v428
    %895 = vmatpush.bf16.msra.mxu0 %v425
    %896 = vmatpush.bf16.msra.mxu0 %v422
    %897 = vmatpush.bf16.msra.mxu0 %v419
    %898 = vmatpush.bf16.msra.mxu0 %v416
    %899 = vmatpush.bf16.msra.mxu0 %v413
    %900 = vmatpush.bf16.msra.mxu0 %v410
    %901 = vmatmul.bf16.gmra.mxu0 %v892
    %v902 = vpop.f32.mrf.mxu0
    %v903 = vadd.f32 0.0, %v902
    %v904 = vpop.f32.mrf.mxu0
    %905 = vdwg.mxu0
    %906 = vmatpush.bf16.msra.mxu0 %v432
    %907 = vmatpush.bf16.msra.mxu0 %v429
    %908 = vmatpush.bf16.msra.mxu0 %v426
    %909 = vmatpush.bf16.msra.mxu0 %v423
    %910 = vmatpush.bf16.msra.mxu0 %v420
    %911 = vmatpush.bf16.msra.mxu0 %v417
    %912 = vmatpush.bf16.msra.mxu0 %v414
    %913 = vmatpush.bf16.msra.mxu0 %v411
    %914 = vmatmul.bf16.gmra.mxu0 %v892
    %v915 = vpop.f32.mrf.mxu0
    %v916 = vadd.f32 0.0, %v915
    %v917 = vpop.f32.mrf.mxu0
    %918 = vdwg.mxu0
    %919 = vmatpush.bf16.msra.mxu0 %v433
    %920 = vmatpush.bf16.msra.mxu0 %v430
    %921 = vmatpush.bf16.msra.mxu0 %v427
    %922 = vmatpush.bf16.msra.mxu0 %v424
    %923 = vmatpush.bf16.msra.mxu0 %v421
    %924 = vmatpush.bf16.msra.mxu0 %v418
    %925 = vmatpush.bf16.msra.mxu0 %v415
    %926 = vmatpush.bf16.msra.mxu0 %v412
    %927 = vmatmul.bf16.gmra.mxu0 %v892
    %v928 = vpop.f32.mrf.mxu0
    %v929 = vadd.f32 0.0, %v928
    %v930 = vpop.f32.mrf.mxu0
    %931 = vdwg.mxu0
    %v932 = vadd.f32 %v265, %v903
    %v933 = vadd.f32 %v294, %v916
    %v934 = vxor.u32 %v932, 2147483648
    %v935 = vxor.u32 %v933, 2147483648
    %v936 = vmul.f32 %v934, 1.442695
    %v937 = vpow.pop %v936
    %v938 = vmul.f32 %v935, 1.442695
    %v939 = vpow.pop %v938
    %v940 = vadd.f32 %v937, 1.0
    %v941 = vadd.f32 %v939, 1.0
    %v942 = vrcp.pop %v940
    %v943 = vmul.f32 %v940, %v942
    %v944 = vsub.f32 1.0, %v943
    %v945 = vmul.f32 %v942, %v944
    %v946 = vadd.f32 %v942, %v945
    %vm947 = vweird.f32 %v940
    %vm948 = vweird.f32 %v942
    %vm949 = vmor %vm947, %vm948
    %v950 = vsel %vm949, %v942, %v946
    %v951 = vand.u32 2147483647, %v940
    %vm952 = vcmp.eq.f32.partialorder %v951, 8.507059e+37
    %v953 = vand.u32 %v940, 2147483648
    %v954 = vor.u32 1.1754944e-38, %v953
    %v955 = vsel %vm952, %v954, %v950
    %v956 = vmul.f32 1.0, %v955
    %v957 = vrcp.pop %v941
    %v958 = vmul.f32 %v941, %v957
    %v959 = vsub.f32 1.0, %v958
    %v960 = vmul.f32 %v957, %v959
    %v961 = vadd.f32 %v957, %v960
    %vm962 = vweird.f32 %v941
    %vm963 = vweird.f32 %v957
    %vm964 = vmor %vm962, %vm963
    %v965 = vsel %vm964, %v957, %v961
    %v966 = vand.u32 2147483647, %v941
    %vm967 = vcmp.eq.f32.partialorder %v966, 8.507059e+37
    %v968 = vand.u32 %v941, 2147483648
    %v969 = vor.u32 1.1754944e-38, %v968
    %v970 = vsel %vm967, %v969, %v965
    %v971 = vmul.f32 1.0, %v970
    %v972 = vadd.f32 %v929, %v111
    %v973 = vmul.f32 %v956, %v972
    %v974 = vadd.f32 %v323, %v973
    %v975 = vtanh.pop %v974
    %v976 = vsub.f32 %v891, %v975
    %v977 = vmul.f32 %v971, %v976
    %v978 = vadd.f32 %v975, %v977
    %v979 = vpack.c.bf16 %v978, %v978
    %980 = vmatpush.bf16.msra.mxu0 %v431
    %981 = vmatpush.bf16.msra.mxu0 %v428
    %982 = vmatpush.bf16.msra.mxu0 %v425
    %983 = vmatpush.bf16.msra.mxu0 %v422
    %984 = vmatpush.bf16.msra.mxu0 %v419
    %985 = vmatpush.bf16.msra.mxu0 %v416
    %986 = vmatpush.bf16.msra.mxu0 %v413
    %987 = vmatpush.bf16.msra.mxu0 %v410
    %988 = vmatmul.bf16.gmra.mxu0 %v979
    %v989 = vpop.f32.mrf.mxu0
    %v990 = vadd.f32 0.0, %v989
    %v991 = vpop.f32.mrf.mxu0
    %992 = vdwg.mxu0
    %993 = vmatpush.bf16.msra.mxu0 %v432
    %994 = vmatpush.bf16.msra.mxu0 %v429
    %995 = vmatpush.bf16.msra.mxu0 %v426
    %996 = vmatpush.bf16.msra.mxu0 %v423
    %997 = vmatpush.bf16.msra.mxu0 %v420
    %998 = vmatpush.bf16.msra.mxu0 %v417
    %999 = vmatpush.bf16.msra.mxu0 %v414
    %1000 = vmatpush.bf16.msra.mxu0 %v411
    %1001 = vmatmul.bf16.gmra.mxu0 %v979
    %v1002 = vpop.f32.mrf.mxu0
    %v1003 = vadd.f32 0.0, %v1002
    %v1004 = vpop.f32.mrf.mxu0
    %1005 = vdwg.mxu0
    %1006 = vmatpush.bf16.msra.mxu0 %v433
    %1007 = vmatpush.bf16.msra.mxu0 %v430
    %1008 = vmatpush.bf16.msra.mxu0 %v427
    %1009 = vmatpush.bf16.msra.mxu0 %v424
    %1010 = vmatpush.bf16.msra.mxu0 %v421
    %1011 = vmatpush.bf16.msra.mxu0 %v418
    %1012 = vmatpush.bf16.msra.mxu0 %v415
    %1013 = vmatpush.bf16.msra.mxu0 %v412
    %1014 = vmatmul.bf16.gmra.mxu0 %v979
    %v1015 = vpop.f32.mrf.mxu0
    %v1016 = vadd.f32 0.0, %v1015
    %v1017 = vpop.f32.mrf.mxu0
    %1018 = vdwg.mxu0
    %v1019 = vadd.f32 %v268, %v990
    %v1020 = vadd.f32 %v297, %v1003
    %v1021 = vxor.u32 %v1019, 2147483648
    %v1022 = vxor.u32 %v1020, 2147483648
    %v1023 = vmul.f32 %v1021, 1.442695
    %v1024 = vpow.pop %v1023
    %v1025 = vmul.f32 %v1022, 1.442695
    %v1026 = vpow.pop %v1025
    %v1027 = vadd.f32 %v1024, 1.0
    %v1028 = vadd.f32 %v1026, 1.0
    %v1029 = vrcp.pop %v1027
    %v1030 = vmul.f32 %v1027, %v1029
    %v1031 = vsub.f32 1.0, %v1030
    %v1032 = vmul.f32 %v1029, %v1031
    %v1033 = vadd.f32 %v1029, %v1032
    %vm1034 = vweird.f32 %v1027
    %vm1035 = vweird.f32 %v1029
    %vm1036 = vmor %vm1034, %vm1035
    %v1037 = vsel %vm1036, %v1029, %v1033
    %v1038 = vand.u32 2147483647, %v1027
    %vm1039 = vcmp.eq.f32.partialorder %v1038, 8.507059e+37
    %v1040 = vand.u32 %v1027, 2147483648
    %v1041 = vor.u32 1.1754944e-38, %v1040
    %v1042 = vsel %vm1039, %v1041, %v1037
    %v1043 = vmul.f32 1.0, %v1042
    %v1044 = vrcp.pop %v1028
    %v1045 = vmul.f32 %v1028, %v1044
    %v1046 = vsub.f32 1.0, %v1045
    %v1047 = vmul.f32 %v1044, %v1046
    %v1048 = vadd.f32 %v1044, %v1047
    %vm1049 = vweird.f32 %v1028
    %vm1050 = vweird.f32 %v1044
    %vm1051 = vmor %vm1049, %vm1050
    %v1052 = vsel %vm1051, %v1044, %v1048
    %v1053 = vand.u32 2147483647, %v1028
    %vm1054 = vcmp.eq.f32.partialorder %v1053, 8.507059e+37
    %v1055 = vand.u32 %v1028, 2147483648
    %v1056 = vor.u32 1.1754944e-38, %v1055
    %v1057 = vsel %vm1054, %v1056, %v1052
    %v1058 = vmul.f32 1.0, %v1057
    %v1059 = vadd.f32 %v1016, %v111
    %v1060 = vmul.f32 %v1043, %v1059
    %v1061 = vadd.f32 %v326, %v1060
    %v1062 = vtanh.pop %v1061
    %v1063 = vsub.f32 %v978, %v1062
    %v1064 = vmul.f32 %v1058, %v1063
    %v1065 = vadd.f32 %v1062, %v1064
    %v1066 = vpack.c.bf16 %v1065, %v1065
    %1067 = vmatpush.bf16.msra.mxu0 %v431
    %1068 = vmatpush.bf16.msra.mxu0 %v428
    %1069 = vmatpush.bf16.msra.mxu0 %v425
    %1070 = vmatpush.bf16.msra.mxu0 %v422
    %1071 = vmatpush.bf16.msra.mxu0 %v419
    %1072 = vmatpush.bf16.msra.mxu0 %v416
    %1073 = vmatpush.bf16.msra.mxu0 %v413
    %1074 = vmatpush.bf16.msra.mxu0 %v410
    %1075 = vmatmul.bf16.gmra.mxu0 %v1066
    %v1076 = vpop.f32.mrf.mxu0
    %v1077 = vadd.f32 0.0, %v1076
    %v1078 = vpop.f32.mrf.mxu0
    %1079 = vdwg.mxu0
    %1080 = vmatpush.bf16.msra.mxu0 %v432
    %1081 = vmatpush.bf16.msra.mxu0 %v429
    %1082 = vmatpush.bf16.msra.mxu0 %v426
    %1083 = vmatpush.bf16.msra.mxu0 %v423
    %1084 = vmatpush.bf16.msra.mxu0 %v420
    %1085 = vmatpush.bf16.msra.mxu0 %v417
    %1086 = vmatpush.bf16.msra.mxu0 %v414
    %1087 = vmatpush.bf16.msra.mxu0 %v411
    %1088 = vmatmul.bf16.gmra.mxu0 %v1066
    %v1089 = vpop.f32.mrf.mxu0
    %v1090 = vadd.f32 0.0, %v1089
    %v1091 = vpop.f32.mrf.mxu0
    %1092 = vdwg.mxu0
    %1093 = vmatpush.bf16.msra.mxu0 %v433
    %1094 = vmatpush.bf16.msra.mxu0 %v430
    %1095 = vmatpush.bf16.msra.mxu0 %v427
    %1096 = vmatpush.bf16.msra.mxu0 %v424
    %1097 = vmatpush.bf16.msra.mxu0 %v421
    %1098 = vmatpush.bf16.msra.mxu0 %v418
    %1099 = vmatpush.bf16.msra.mxu0 %v415
    %1100 = vmatpush.bf16.msra.mxu0 %v412
    %1101 = vmatmul.bf16.gmra.mxu0 %v1066
    %v1102 = vpop.f32.mrf.mxu0
    %v1103 = vadd.f32 0.0, %v1102
    %v1104 = vpop.f32.mrf.mxu0
    %1105 = vdwg.mxu0
    %v1106 = vadd.f32 %v270, %v1077
    %v1107 = vadd.f32 %v299, %v1090
    %v1108 = vxor.u32 %v1106, 2147483648
    %v1109 = vxor.u32 %v1107, 2147483648
    %v1110 = vmul.f32 %v1108, 1.442695
    %v1111 = vpow.pop %v1110
    %v1112 = vmul.f32 %v1109, 1.442695
    %v1113 = vpow.pop %v1112
    %v1114 = vadd.f32 %v1111, 1.0
    %v1115 = vadd.f32 %v1113, 1.0
    %v1116 = vrcp.pop %v1114
    %v1117 = vmul.f32 %v1114, %v1116
    %v1118 = vsub.f32 1.0, %v1117
    %v1119 = vmul.f32 %v1116, %v1118
    %v1120 = vadd.f32 %v1116, %v1119
    %vm1121 = vweird.f32 %v1114
    %vm1122 = vweird.f32 %v1116
    %vm1123 = vmor %vm1121, %vm1122
    %v1124 = vsel %vm1123, %v1116, %v1120
    %v1125 = vand.u32 2147483647, %v1114
    %vm1126 = vcmp.eq.f32.partialorder %v1125, 8.507059e+37
    %v1127 = vand.u32 %v1114, 2147483648
    %v1128 = vor.u32 1.1754944e-38, %v1127
    %v1129 = vsel %vm1126, %v1128, %v1124
    %v1130 = vmul.f32 1.0, %v1129
    %v1131 = vrcp.pop %v1115
    %v1132 = vmul.f32 %v1115, %v1131
    %v1133 = vsub.f32 1.0, %v1132
    %v1134 = vmul.f32 %v1131, %v1133
    %v1135 = vadd.f32 %v1131, %v1134
    %vm1136 = vweird.f32 %v1115
    %vm1137 = vweird.f32 %v1131
    %vm1138 = vmor %vm1136, %vm1137
    %v1139 = vsel %vm1138, %v1131, %v1135
    %v1140 = vand.u32 2147483647, %v1115
    %vm1141 = vcmp.eq.f32.partialorder %v1140, 8.507059e+37
    %v1142 = vand.u32 %v1115, 2147483648
    %v1143 = vor.u32 1.1754944e-38, %v1142
    %v1144 = vsel %vm1141, %v1143, %v1139
    %v1145 = vmul.f32 1.0, %v1144
    %v1146 = vadd.f32 %v1103, %v111
    %v1147 = vmul.f32 %v1130, %v1146
    %v1148 = vadd.f32 %v328, %v1147
    %v1149 = vtanh.pop %v1148
    %v1150 = vsub.f32 %v1065, %v1149
    %v1151 = vmul.f32 %v1145, %v1150
    %v1152 = vadd.f32 %v1149, %v1151
    %v1153 = vpack.c.bf16 %v630, %v543
    %v1154 = vpack.c.bf16 %v804, %v717
    %v1155 = vpack.c.bf16 %v978, %v891
    %v1156 = vpack.c.bf16 %v1152, %v1065
    %s1157 = scalar_lea.vmem [#allocation2], 384
    %v1158 = vld [vmem:[%s1157] sm:$0xff]
    %v1159 = vld [vmem:[%s1157 + $0x8] sm:$0xf]
    %v1160 = vld [vmem:[%s1157 + $0xc] sm:$0xff]
    %v1161 = vld [vmem:[%s1157 + $0x14] sm:$0xf]
    %v1162 = vld [vmem:[%s1157 + $0x18] sm:$0xff]
    %v1163 = vld [vmem:[%s1157 + $0x20] sm:$0xf]
    %v1164 = vld [vmem:[%s1157 + $0x24] sm:$0xff]
    %v1165 = vld [vmem:[%s1157 + $0x2c] sm:$0xf]
    %v1166 = vld [vmem:[%s1157 + $0x30] sm:$0xff]
    %v1167 = vld [vmem:[%s1157 + $0x38] sm:$0xf]
    %v1168 = vld [vmem:[%s1157 + $0x3c] sm:$0xff]
    %v1169 = vld [vmem:[%s1157 + $0x44] sm:$0xf]
    %v1170 = vld [vmem:[%s1157 + $0x48] sm:$0xff]
    %v1171 = vld [vmem:[%s1157 + $0x50] sm:$0xf]
    %v1172 = vld [vmem:[%s1157 + $0x54] sm:$0xff]
    %v1173 = vld [vmem:[%s1157 + $0x5c] sm:$0xf]
    %v1174 = vld [vmem:[%s1157 + $0x60] sm:$0xff]
    %v1175 = vld [vmem:[%s1157 + $0x68] sm:$0xf]
    %v1176 = vld [vmem:[%s1157 + $0x6c] sm:$0xff]
    %v1177 = vld [vmem:[%s1157 + $0x74] sm:$0xf]
    %v1178 = vld [vmem:[%s1157 + $0x78] sm:$0xff]
    %v1179 = vld [vmem:[%s1157 + $0x80] sm:$0xf]
    %v1180 = vld [vmem:[%s1157 + $0x84] sm:$0xff]
    %v1181 = vld [vmem:[%s1157 + $0x8c] sm:$0xf]
    %v1182 = vld [vmem:[%s1157 + $0x90] sm:$0xff]
    %v1183 = vld [vmem:[%s1157 + $0x98] sm:$0xf]
    %v1184 = vld [vmem:[%s1157 + $0x9c] sm:$0xff]
    %v1185 = vld [vmem:[%s1157 + $0xa4] sm:$0xf]
    %v1186 = vld [vmem:[%s1157 + $0xa8] sm:$0xff]
    %v1187 = vld [vmem:[%s1157 + $0xb0] sm:$0xf]
    %v1188 = vld [vmem:[%s1157 + $0xb4] sm:$0xff]
    %v1189 = vld [vmem:[%s1157 + $0xbc] sm:$0xf]
    %s1190 = scalar_lea.vmem [#allocation2], 576
    %v1191 = vld [vmem:[%s1190] sm:$0xff]
    %v1192 = vld [vmem:[%s1190 + $0x8] sm:$0xf]
    %v1193 = vld [vmem:[%s1190 + $0xc] sm:$0xff]
    %v1194 = vld [vmem:[%s1190 + $0x14] sm:$0xf]
    %v1195 = vld [vmem:[%s1190 + $0x18] sm:$0xff]
    %v1196 = vld [vmem:[%s1190 + $0x20] sm:$0xf]
    %v1197 = vld [vmem:[%s1190 + $0x24] sm:$0xff]
    %v1198 = vld [vmem:[%s1190 + $0x2c] sm:$0xf]
    %v1199 = vld [vmem:[%s1190 + $0x30] sm:$0xff]
    %v1200 = vld [vmem:[%s1190 + $0x38] sm:$0xf]
    %v1201 = vld [vmem:[%s1190 + $0x3c] sm:$0xff]
    %v1202 = vld [vmem:[%s1190 + $0x44] sm:$0xf]
    %v1203 = vld [vmem:[%s1190 + $0x48] sm:$0xff]
    %v1204 = vld [vmem:[%s1190 + $0x50] sm:$0xf]
    %v1205 = vld [vmem:[%s1190 + $0x54] sm:$0xff]
    %v1206 = vld [vmem:[%s1190 + $0x5c] sm:$0xf]
    %v1207 = vld [vmem:[%s1190 + $0x60] sm:$0xff]
    %v1208 = vld [vmem:[%s1190 + $0x68] sm:$0xf]
    %v1209 = vld [vmem:[%s1190 + $0x6c] sm:$0xff]
    %v1210 = vld [vmem:[%s1190 + $0x74] sm:$0xf]
    %v1211 = vld [vmem:[%s1190 + $0x78] sm:$0xff]
    %v1212 = vld [vmem:[%s1190 + $0x80] sm:$0xf]
    %v1213 = vld [vmem:[%s1190 + $0x84] sm:$0xff]
    %v1214 = vld [vmem:[%s1190 + $0x8c] sm:$0xf]
    %v1215 = vld [vmem:[%s1190 + $0x90] sm:$0xff]
    %v1216 = vld [vmem:[%s1190 + $0x98] sm:$0xf]
    %v1217 = vld [vmem:[%s1190 + $0x9c] sm:$0xff]
    %v1218 = vld [vmem:[%s1190 + $0xa4] sm:$0xf]
    %v1219 = vld [vmem:[%s1190 + $0xa8] sm:$0xff]
    %v1220 = vld [vmem:[%s1190 + $0xb0] sm:$0xf]
    %v1221 = vld [vmem:[%s1190 + $0xb4] sm:$0xff]
    %v1222 = vld [vmem:[%s1190 + $0xbc] sm:$0xf]
    %s1223 = scalar_lea.vmem %s2, 24
    %v1224 = vld [vmem:[%s1223] sm:$0xff]
    %v1225 = vld [vmem:[%s1223 + $0x8] sm:$0xff]
    %v1226 = vld [vmem:[%s1223 + $0x10] sm:$0xff]
    %v1227 = vperm.slane %v1224, 1
    %v1228 = vperm.slane %v1224, 0
    %v1229 = vperm.slane %v1225, 0
    %v1230 = vperm.slane %v1226, 0
    %v1263 = vunpack.c.l.b16 %v1158
    %v1264 = vunpack.c.h.b16 %v1158
    %v1265 = vunpack.c.l.b16 %v1159
    %v1266 = vunpack.c.l.b16 %v1160
    %v1267 = vunpack.c.h.b16 %v1160
    %v1268 = vunpack.c.l.b16 %v1161
    %v1269 = vunpack.c.l.b16 %v1162
    %v1270 = vunpack.c.h.b16 %v1162
    %v1271 = vunpack.c.l.b16 %v1163
    %v1272 = vunpack.c.l.b16 %v1164
    %v1273 = vunpack.c.h.b16 %v1164
    %v1274 = vunpack.c.l.b16 %v1165
    %v1275 = vunpack.c.l.b16 %v1166
    %v1276 = vunpack.c.h.b16 %v1166
    %v1277 = vunpack.c.l.b16 %v1167
    %v1278 = vunpack.c.l.b16 %v1168
    %v1279 = vunpack.c.h.b16 %v1168
    %v1280 = vunpack.c.l.b16 %v1169
    %v1281 = vunpack.c.l.b16 %v1170
    %v1282 = vunpack.c.h.b16 %v1170
    %v1283 = vunpack.c.l.b16 %v1171
    %v1284 = vunpack.c.l.b16 %v1172
    %v1285 = vunpack.c.h.b16 %v1172
    %v1286 = vunpack.c.l.b16 %v1173
    %v1287 = vunpack.c.l.b16 %v1174
    %v1288 = vunpack.c.h.b16 %v1174
    %v1289 = vunpack.c.l.b16 %v1175
    %v1290 = vunpack.c.l.b16 %v1176
    %v1291 = vunpack.c.h.b16 %v1176
    %v1292 = vunpack.c.l.b16 %v1177
    %v1293 = vunpack.c.l.b16 %v1178
    %v1294 = vunpack.c.h.b16 %v1178
    %v1295 = vunpack.c.l.b16 %v1179
    %v1296 = vunpack.c.l.b16 %v1180
    %v1297 = vunpack.c.h.b16 %v1180
    %v1298 = vunpack.c.l.b16 %v1181
    %v1299 = vunpack.c.l.b16 %v1182
    %v1300 = vunpack.c.h.b16 %v1182
    %v1301 = vunpack.c.l.b16 %v1183
    %v1302 = vunpack.c.l.b16 %v1184
    %v1303 = vunpack.c.h.b16 %v1184
    %v1304 = vunpack.c.l.b16 %v1185
    %v1305 = vunpack.c.l.b16 %v1186
    %v1306 = vunpack.c.h.b16 %v1186
    %v1307 = vunpack.c.l.b16 %v1187
    %v1308 = vunpack.c.l.b16 %v1188
    %v1309 = vunpack.c.h.b16 %v1188
    %v1310 = vunpack.c.l.b16 %v1189
    %v1311 = vpack.c.b16 %v1266, %v1263
    %v1312 = vpack.c.b16 %v1267, %v1264
    %v1313 = vpack.c.b16 %v1268, %v1265
    %v1314 = vpack.c.b16 %v1272, %v1269
    %v1315 = vpack.c.b16 %v1273, %v1270
    %v1316 = vpack.c.b16 %v1274, %v1271
    %v1317 = vpack.c.b16 %v1278, %v1275
    %v1318 = vpack.c.b16 %v1279, %v1276
    %v1319 = vpack.c.b16 %v1280, %v1277
    %v1320 = vpack.c.b16 %v1284, %v1281
    %v1321 = vpack.c.b16 %v1285, %v1282
    %v1322 = vpack.c.b16 %v1286, %v1283
    %v1323 = vpack.c.b16 %v1290, %v1287
    %v1324 = vpack.c.b16 %v1291, %v1288
    %v1325 = vpack.c.b16 %v1292, %v1289
    %v1326 = vpack.c.b16 %v1296, %v1293
    %v1327 = vpack.c.b16 %v1297, %v1294
    %v1328 = vpack.c.b16 %v1298, %v1295
    %v1329 = vpack.c.b16 %v1302, %v1299
    %v1330 = vpack.c.b16 %v1303, %v1300
    %v1331 = vpack.c.b16 %v1304, %v1301
    %v1332 = vpack.c.b16 %v1308, %v1305
    %v1333 = vpack.c.b16 %v1309, %v1306
    %v1334 = vpack.c.b16 %v1310, %v1307
    %1359 = vmatpush.bf16.msra.mxu0 %v1332
    %1360 = vmatpush.bf16.msra.mxu0 %v1329
    %1361 = vmatpush.bf16.msra.mxu0 %v1326
    %1362 = vmatpush.bf16.msra.mxu0 %v1323
    %1363 = vmatpush.bf16.msra.mxu0 %v1320
    %1364 = vmatpush.bf16.msra.mxu0 %v1317
    %1365 = vmatpush.bf16.msra.mxu0 %v1314
    %1366 = vmatpush.bf16.msra.mxu0 %v1311
    %1367 = vmatmul.bf16.gmra.mxu0 %v1153
    %v1368 = vpop.f32.mrf.mxu0
    %v1369 = vadd.f32 %v1228, %v1368
    %v1370 = vpop.f32.mrf.mxu0
    %v1371 = vadd.f32 %v1228, %v1370
    %1372 = vmatmul.bf16.gmra.mxu0 %v1154
    %v1373 = vpop.f32.mrf.mxu0
    %v1374 = vadd.f32 %v1228, %v1373
    %v1375 = vpop.f32.mrf.mxu0
    %v1376 = vadd.f32 %v1228, %v1375
    %1377 = vmatmul.bf16.gmra.mxu0 %v1155
    %v1378 = vpop.f32.mrf.mxu0
    %v1379 = vadd.f32 %v1228, %v1378
    %v1380 = vpop.f32.mrf.mxu0
    %v1381 = vadd.f32 %v1228, %v1380
    %1382 = vmatmul.bf16.gmra.mxu0 %v1156
    %v1383 = vpop.f32.mrf.mxu0
    %v1384 = vadd.f32 %v1228, %v1383
    %v1385 = vpop.f32.mrf.mxu0
    %v1386 = vadd.f32 %v1228, %v1385
    %1387 = vdwg.mxu0
    %1388 = vmatpush.bf16.msra.mxu0 %v1333
    %1389 = vmatpush.bf16.msra.mxu0 %v1330
    %1390 = vmatpush.bf16.msra.mxu0 %v1327
    %1391 = vmatpush.bf16.msra.mxu0 %v1324
    %1392 = vmatpush.bf16.msra.mxu0 %v1321
    %1393 = vmatpush.bf16.msra.mxu0 %v1318
    %1394 = vmatpush.bf16.msra.mxu0 %v1315
    %1395 = vmatpush.bf16.msra.mxu0 %v1312
    %1396 = vmatmul.bf16.gmra.mxu0 %v1153
    %v1397 = vpop.f32.mrf.mxu0
    %v1398 = vadd.f32 %v1229, %v1397
    %v1399 = vpop.f32.mrf.mxu0
    %v1400 = vadd.f32 %v1229, %v1399
    %1401 = vmatmul.bf16.gmra.mxu0 %v1154
    %v1402 = vpop.f32.mrf.mxu0
    %v1403 = vadd.f32 %v1229, %v1402
    %v1404 = vpop.f32.mrf.mxu0
    %v1405 = vadd.f32 %v1229, %v1404
    %1406 = vmatmul.bf16.gmra.mxu0 %v1155
    %v1407 = vpop.f32.mrf.mxu0
    %v1408 = vadd.f32 %v1229, %v1407
    %v1409 = vpop.f32.mrf.mxu0
    %v1410 = vadd.f32 %v1229, %v1409
    %1411 = vmatmul.bf16.gmra.mxu0 %v1156
    %v1412 = vpop.f32.mrf.mxu0
    %v1413 = vadd.f32 %v1229, %v1412
    %v1414 = vpop.f32.mrf.mxu0
    %v1415 = vadd.f32 %v1229, %v1414
    %1416 = vdwg.mxu0
    %1417 = vmatpush.bf16.msra.mxu0 %v1334
    %1418 = vmatpush.bf16.msra.mxu0 %v1331
    %1419 = vmatpush.bf16.msra.mxu0 %v1328
    %1420 = vmatpush.bf16.msra.mxu0 %v1325
    %1421 = vmatpush.bf16.msra.mxu0 %v1322
    %1422 = vmatpush.bf16.msra.mxu0 %v1319
    %1423 = vmatpush.bf16.msra.mxu0 %v1316
    %1424 = vmatpush.bf16.msra.mxu0 %v1313
    %1425 = vmatmul.bf16.gmra.mxu0 %v1153
    %v1426 = vpop.f32.mrf.mxu0
    %v1427 = vadd.f32 %v1230, %v1426
    %v1428 = vpop.f32.mrf.mxu0
    %v1429 = vadd.f32 %v1230, %v1428
    %1430 = vmatmul.bf16.gmra.mxu0 %v1154
    %v1431 = vpop.f32.mrf.mxu0
    %v1432 = vadd.f32 %v1230, %v1431
    %v1433 = vpop.f32.mrf.mxu0
    %v1434 = vadd.f32 %v1230, %v1433
    %1435 = vmatmul.bf16.gmra.mxu0 %v1155
    %v1436 = vpop.f32.mrf.mxu0
    %v1437 = vadd.f32 %v1230, %v1436
    %v1438 = vpop.f32.mrf.mxu0
    %v1439 = vadd.f32 %v1230, %v1438
    %1440 = vmatmul.bf16.gmra.mxu0 %v1156
    %v1441 = vpop.f32.mrf.mxu0
    %v1442 = vadd.f32 %v1230, %v1441
    %v1443 = vpop.f32.mrf.mxu0
    %v1444 = vadd.f32 %v1230, %v1443
    %1445 = vdwg.mxu0
    %v1478 = vunpack.c.l.b16 %v1191
    %v1479 = vunpack.c.h.b16 %v1191
    %v1480 = vunpack.c.l.b16 %v1192
    %v1481 = vunpack.c.l.b16 %v1193
    %v1482 = vunpack.c.h.b16 %v1193
    %v1483 = vunpack.c.l.b16 %v1194
    %v1484 = vunpack.c.l.b16 %v1195
    %v1485 = vunpack.c.h.b16 %v1195
    %v1486 = vunpack.c.l.b16 %v1196
    %v1487 = vunpack.c.l.b16 %v1197
    %v1488 = vunpack.c.h.b16 %v1197
    %v1489 = vunpack.c.l.b16 %v1198
    %v1490 = vunpack.c.l.b16 %v1199
    %v1491 = vunpack.c.h.b16 %v1199
    %v1492 = vunpack.c.l.b16 %v1200
    %v1493 = vunpack.c.l.b16 %v1201
    %v1494 = vunpack.c.h.b16 %v1201
    %v1495 = vunpack.c.l.b16 %v1202
    %v1496 = vunpack.c.l.b16 %v1203
    %v1497 = vunpack.c.h.b16 %v1203
    %v1498 = vunpack.c.l.b16 %v1204
    %v1499 = vunpack.c.l.b16 %v1205
    %v1500 = vunpack.c.h.b16 %v1205
    %v1501 = vunpack.c.l.b16 %v1206
    %v1502 = vunpack.c.l.b16 %v1207
    %v1503 = vunpack.c.h.b16 %v1207
    %v1504 = vunpack.c.l.b16 %v1208
    %v1505 = vunpack.c.l.b16 %v1209
    %v1506 = vunpack.c.h.b16 %v1209
    %v1507 = vunpack.c.l.b16 %v1210
    %v1508 = vunpack.c.l.b16 %v1211
    %v1509 = vunpack.c.h.b16 %v1211
    %v1510 = vunpack.c.l.b16 %v1212
    %v1511 = vunpack.c.l.b16 %v1213
    %v1512 = vunpack.c.h.b16 %v1213
    %v1513 = vunpack.c.l.b16 %v1214
    %v1514 = vunpack.c.l.b16 %v1215
    %v1515 = vunpack.c.h.b16 %v1215
    %v1516 = vunpack.c.l.b16 %v1216
    %v1517 = vunpack.c.l.b16 %v1217
    %v1518 = vunpack.c.h.b16 %v1217
    %v1519 = vunpack.c.l.b16 %v1218
    %v1520 = vunpack.c.l.b16 %v1219
    %v1521 = vunpack.c.h.b16 %v1219
    %v1522 = vunpack.c.l.b16 %v1220
    %v1523 = vunpack.c.l.b16 %v1221
    %v1524 = vunpack.c.h.b16 %v1221
    %v1525 = vunpack.c.l.b16 %v1222
    %v1526 = vpack.c.b16 %v1481, %v1478
    %v1527 = vpack.c.b16 %v1482, %v1479
    %v1528 = vpack.c.b16 %v1483, %v1480
    %v1529 = vpack.c.b16 %v1487, %v1484
    %v1530 = vpack.c.b16 %v1488, %v1485
    %v1531 = vpack.c.b16 %v1489, %v1486
    %v1532 = vpack.c.b16 %v1493, %v1490
    %v1533 = vpack.c.b16 %v1494, %v1491
    %v1534 = vpack.c.b16 %v1495, %v1492
    %v1535 = vpack.c.b16 %v1499, %v1496
    %v1536 = vpack.c.b16 %v1500, %v1497
    %v1537 = vpack.c.b16 %v1501, %v1498
    %v1538 = vpack.c.b16 %v1505, %v1502
    %v1539 = vpack.c.b16 %v1506, %v1503
    %v1540 = vpack.c.b16 %v1507, %v1504
    %v1541 = vpack.c.b16 %v1511, %v1508
    %v1542 = vpack.c.b16 %v1512, %v1509
    %v1543 = vpack.c.b16 %v1513, %v1510
    %v1544 = vpack.c.b16 %v1517, %v1514
    %v1545 = vpack.c.b16 %v1518, %v1515
    %v1546 = vpack.c.b16 %v1519, %v1516
    %v1547 = vpack.c.b16 %v1523, %v1520
    %v1548 = vpack.c.b16 %v1524, %v1521
    %v1549 = vpack.c.b16 %v1525, %v1522
    %1574 = vmatpush.bf16.msra.mxu0 %v1547
    %1575 = vmatpush.bf16.msra.mxu0 %v1544
    %1576 = vmatpush.bf16.msra.mxu0 %v1541
    %1577 = vmatpush.bf16.msra.mxu0 %v1538
    %1578 = vmatpush.bf16.msra.mxu0 %v1535
    %1579 = vmatpush.bf16.msra.mxu0 %v1532
    %1580 = vmatpush.bf16.msra.mxu0 %v1529
    %1581 = vmatpush.bf16.msra.mxu0 %v1526
    %1582 = vmatmul.bf16.gmra.mxu0 0
    %v1583 = vpop.f32.mrf.mxu0
    %v1584 = vadd.f32 0.0, %v1583
    %v1585 = vpop.f32.mrf.mxu0
    %1586 = vdwg.mxu0
    %1587 = vmatpush.bf16.msra.mxu0 %v1548
    %1588 = vmatpush.bf16.msra.mxu0 %v1545
    %1589 = vmatpush.bf16.msra.mxu0 %v1542
    %1590 = vmatpush.bf16.msra.mxu0 %v1539
    %1591 = vmatpush.bf16.msra.mxu0 %v1536
    %1592 = vmatpush.bf16.msra.mxu0 %v1533
    %1593 = vmatpush.bf16.msra.mxu0 %v1530
    %1594 = vmatpush.bf16.msra.mxu0 %v1527
    %1595 = vmatmul.bf16.gmra.mxu0 0
    %v1596 = vpop.f32.mrf.mxu0
    %v1597 = vadd.f32 0.0, %v1596
    %v1598 = vpop.f32.mrf.mxu0
    %1599 = vdwg.mxu0
    %1600 = vmatpush.bf16.msra.mxu0 %v1549
    %1601 = vmatpush.bf16.msra.mxu0 %v1546
    %1602 = vmatpush.bf16.msra.mxu0 %v1543
    %1603 = vmatpush.bf16.msra.mxu0 %v1540
    %1604 = vmatpush.bf16.msra.mxu0 %v1537
    %1605 = vmatpush.bf16.msra.mxu0 %v1534
    %1606 = vmatpush.bf16.msra.mxu0 %v1531
    %1607 = vmatpush.bf16.msra.mxu0 %v1528
    %1608 = vmatmul.bf16.gmra.mxu0 0
    %v1609 = vpop.f32.mrf.mxu0
    %v1610 = vadd.f32 0.0, %v1609
    %v1611 = vpop.f32.mrf.mxu0
    %1612 = vdwg.mxu0
    %v1613 = vadd.f32 %v1369, %v1584
    %v1614 = vadd.f32 %v1398, %v1597
    %v1615 = vxor.u32 %v1613, 2147483648
    %v1616 = vxor.u32 %v1614, 2147483648
    %v1617 = vmul.f32 %v1615, 1.442695
    %v1618 = vpow.pop %v1617
    %v1619 = vmul.f32 %v1616, 1.442695
    %v1620 = vpow.pop %v1619
    %v1621 = vadd.f32 %v1618, 1.0
    %v1622 = vadd.f32 %v1620, 1.0
    %v1623 = vrcp.pop %v1621
    %v1624 = vmul.f32 %v1621, %v1623
    %v1625 = vsub.f32 1.0, %v1624
    %v1626 = vmul.f32 %v1623, %v1625
    %v1627 = vadd.f32 %v1623, %v1626
    %vm1628 = vweird.f32 %v1621
    %vm1629 = vweird.f32 %v1623
    %vm1630 = vmor %vm1628, %vm1629
    %v1631 = vsel %vm1630, %v1623, %v1627
    %v1632 = vand.u32 2147483647, %v1621
    %vm1633 = vcmp.eq.f32.partialorder %v1632, 8.507059e+37
    %v1634 = vand.u32 %v1621, 2147483648
    %v1635 = vor.u32 1.1754944e-38, %v1634
    %v1636 = vsel %vm1633, %v1635, %v1631
    %v1637 = vmul.f32 1.0, %v1636
    %v1638 = vrcp.pop %v1622
    %v1639 = vmul.f32 %v1622, %v1638
    %v1640 = vsub.f32 1.0, %v1639
    %v1641 = vmul.f32 %v1638, %v1640
    %v1642 = vadd.f32 %v1638, %v1641
    %vm1643 = vweird.f32 %v1622
    %vm1644 = vweird.f32 %v1638
    %vm1645 = vmor %vm1643, %vm1644
    %v1646 = vsel %vm1645, %v1638, %v1642
    %v1647 = vand.u32 2147483647, %v1622
    %vm1648 = vcmp.eq.f32.partialorder %v1647, 8.507059e+37
    %v1649 = vand.u32 %v1622, 2147483648
    %v1650 = vor.u32 1.1754944e-38, %v1649
    %v1651 = vsel %vm1648, %v1650, %v1646
    %v1652 = vmul.f32 1.0, %v1651
    %v1653 = vadd.f32 %v1610, %v1227
    %v1654 = vmul.f32 %v1637, %v1653
    %v1655 = vadd.f32 %v1427, %v1654
    %v1656 = vtanh.pop %v1655
    %v1657 = vsub.f32 0.0, %v1656
    %v1658 = vmul.f32 %v1652, %v1657
    %v1659 = vadd.f32 %v1656, %v1658
    %v1660 = vpack.c.bf16 %v1659, %v1659
    %1661 = vmatpush.bf16.msra.mxu0 %v1547
    %1662 = vmatpush.bf16.msra.mxu0 %v1544
    %1663 = vmatpush.bf16.msra.mxu0 %v1541
    %1664 = vmatpush.bf16.msra.mxu0 %v1538
    %1665 = vmatpush.bf16.msra.mxu0 %v1535
    %1666 = vmatpush.bf16.msra.mxu0 %v1532
    %1667 = vmatpush.bf16.msra.mxu0 %v1529
    %1668 = vmatpush.bf16.msra.mxu0 %v1526
    %1669 = vmatmul.bf16.gmra.mxu0 %v1660
    %v1670 = vpop.f32.mrf.mxu0
    %v1671 = vadd.f32 0.0, %v1670
    %v1672 = vpop.f32.mrf.mxu0
    %1673 = vdwg.mxu0
    %1674 = vmatpush.bf16.msra.mxu0 %v1548
    %1675 = vmatpush.bf16.msra.mxu0 %v1545
    %1676 = vmatpush.bf16.msra.mxu0 %v1542
    %1677 = vmatpush.bf16.msra.mxu0 %v1539
    %1678 = vmatpush.bf16.msra.mxu0 %v1536
    %1679 = vmatpush.bf16.msra.mxu0 %v1533
    %1680 = vmatpush.bf16.msra.mxu0 %v1530
    %1681 = vmatpush.bf16.msra.mxu0 %v1527
    %1682 = vmatmul.bf16.gmra.mxu0 %v1660
    %v1683 = vpop.f32.mrf.mxu0
    %v1684 = vadd.f32 0.0, %v1683
    %v1685 = vpop.f32.mrf.mxu0
    %1686 = vdwg.mxu0
    %1687 = vmatpush.bf16.msra.mxu0 %v1549
    %1688 = vmatpush.bf16.msra.mxu0 %v1546
    %1689 = vmatpush.bf16.msra.mxu0 %v1543
    %1690 = vmatpush.bf16.msra.mxu0 %v1540
    %1691 = vmatpush.bf16.msra.mxu0 %v1537
    %1692 = vmatpush.bf16.msra.mxu0 %v1534
    %1693 = vmatpush.bf16.msra.mxu0 %v1531
    %1694 = vmatpush.bf16.msra.mxu0 %v1528
    %1695 = vmatmul.bf16.gmra.mxu0 %v1660
    %v1696 = vpop.f32.mrf.mxu0
    %v1697 = vadd.f32 0.0, %v1696
    %v1698 = vpop.f32.mrf.mxu0
    %1699 = vdwg.mxu0
    %v1700 = vadd.f32 %v1371, %v1671
    %v1701 = vadd.f32 %v1400, %v1684
    %v1702 = vxor.u32 %v1700, 2147483648
    %v1703 = vxor.u32 %v1701, 2147483648
    %v1704 = vmul.f32 %v1702, 1.442695
    %v1705 = vpow.pop %v1704
    %v1706 = vmul.f32 %v1703, 1.442695
    %v1707 = vpow.pop %v1706
    %v1708 = vadd.f32 %v1705, 1.0
    %v1709 = vadd.f32 %v1707, 1.0
    %v1710 = vrcp.pop %v1708
    %v1711 = vmul.f32 %v1708, %v1710
    %v1712 = vsub.f32 1.0, %v1711
    %v1713 = vmul.f32 %v1710, %v1712
    %v1714 = vadd.f32 %v1710, %v1713
    %vm1715 = vweird.f32 %v1708
    %vm1716 = vweird.f32 %v1710
    %vm1717 = vmor %vm1715, %vm1716
    %v1718 = vsel %vm1717, %v1710, %v1714
    %v1719 = vand.u32 2147483647, %v1708
    %vm1720 = vcmp.eq.f32.partialorder %v1719, 8.507059e+37
    %v1721 = vand.u32 %v1708, 2147483648
    %v1722 = vor.u32 1.1754944e-38, %v1721
    %v1723 = vsel %vm1720, %v1722, %v1718
    %v1724 = vmul.f32 1.0, %v1723
    %v1725 = vrcp.pop %v1709
    %v1726 = vmul.f32 %v1709, %v1725
    %v1727 = vsub.f32 1.0, %v1726
    %v1728 = vmul.f32 %v1725, %v1727
    %v1729 = vadd.f32 %v1725, %v1728
    %vm1730 = vweird.f32 %v1709
    %vm1731 = vweird.f32 %v1725
    %vm1732 = vmor %vm1730, %vm1731
    %v1733 = vsel %vm1732, %v1725, %v1729
    %v1734 = vand.u32 2147483647, %v1709
    %vm1735 = vcmp.eq.f32.partialorder %v1734, 8.507059e+37
    %v1736 = vand.u32 %v1709, 2147483648
    %v1737 = vor.u32 1.1754944e-38, %v1736
    %v1738 = vsel %vm1735, %v1737, %v1733
    %v1739 = vmul.f32 1.0, %v1738
    %v1740 = vadd.f32 %v1697, %v1227
    %v1741 = vmul.f32 %v1724, %v1740
    %v1742 = vadd.f32 %v1429, %v1741
    %v1743 = vtanh.pop %v1742
    %v1744 = vsub.f32 %v1659, %v1743
    %v1745 = vmul.f32 %v1739, %v1744
    %v1746 = vadd.f32 %v1743, %v1745
    %v1747 = vpack.c.bf16 %v1746, %v1746
    %1748 = vmatpush.bf16.msra.mxu0 %v1547
    %1749 = vmatpush.bf16.msra.mxu0 %v1544
    %1750 = vmatpush.bf16.msra.mxu0 %v1541
    %1751 = vmatpush.bf16.msra.mxu0 %v1538
    %1752 = vmatpush.bf16.msra.mxu0 %v1535
    %1753 = vmatpush.bf16.msra.mxu0 %v1532
    %1754 = vmatpush.bf16.msra.mxu0 %v1529
    %1755 = vmatpush.bf16.msra.mxu0 %v1526
    %1756 = vmatmul.bf16.gmra.mxu0 %v1747
    %v1757 = vpop.f32.mrf.mxu0
    %v1758 = vadd.f32 0.0, %v1757
    %v1759 = vpop.f32.mrf.mxu0
    %1760 = vdwg.mxu0
    %1761 = vmatpush.bf16.msra.mxu0 %v1548
    %1762 = vmatpush.bf16.msra.mxu0 %v1545
    %1763 = vmatpush.bf16.msra.mxu0 %v1542
    %1764 = vmatpush.bf16.msra.mxu0 %v1539
    %1765 = vmatpush.bf16.msra.mxu0 %v1536
    %1766 = vmatpush.bf16.msra.mxu0 %v1533
    %1767 = vmatpush.bf16.msra.mxu0 %v1530
    %1768 = vmatpush.bf16.msra.mxu0 %v1527
    %1769 = vmatmul.bf16.gmra.mxu0 %v1747
    %v1770 = vpop.f32.mrf.mxu0
    %v1771 = vadd.f32 0.0, %v1770
    %v1772 = vpop.f32.mrf.mxu0
    %1773 = vdwg.mxu0
    %1774 = vmatpush.bf16.msra.mxu0 %v1549
    %1775 = vmatpush.bf16.msra.mxu0 %v1546
    %1776 = vmatpush.bf16.msra.mxu0 %v1543
    %1777 = vmatpush.bf16.msra.mxu0 %v1540
    %1778 = vmatpush.bf16.msra.mxu0 %v1537
    %1779 = vmatpush.bf16.msra.mxu0 %v1534
    %1780 = vmatpush.bf16.msra.mxu0 %v1531
    %1781 = vmatpush.bf16.msra.mxu0 %v1528
    %1782 = vmatmul.bf16.gmra.mxu0 %v1747
    %v1783 = vpop.f32.mrf.mxu0
    %v1784 = vadd.f32 0.0, %v1783
    %v1785 = vpop.f32.mrf.mxu0
    %1786 = vdwg.mxu0
    %v1787 = vadd.f32 %v1374, %v1758
    %v1788 = vadd.f32 %v1403, %v1771
    %v1789 = vxor.u32 %v1787, 2147483648
    %v1790 = vxor.u32 %v1788, 2147483648
    %v1791 = vmul.f32 %v1789, 1.442695
    %v1792 = vpow.pop %v1791
    %v1793 = vmul.f32 %v1790, 1.442695
    %v1794 = vpow.pop %v1793
    %v1795 = vadd.f32 %v1792, 1.0
    %v1796 = vadd.f32 %v1794, 1.0
    %v1797 = vrcp.pop %v1795
    %v1798 = vmul.f32 %v1795, %v1797
    %v1799 = vsub.f32 1.0, %v1798
    %v1800 = vmul.f32 %v1797, %v1799
    %v1801 = vadd.f32 %v1797, %v1800
    %vm1802 = vweird.f32 %v1795
    %vm1803 = vweird.f32 %v1797
    %vm1804 = vmor %vm1802, %vm1803
    %v1805 = vsel %vm1804, %v1797, %v1801
    %v1806 = vand.u32 2147483647, %v1795
    %vm1807 = vcmp.eq.f32.partialorder %v1806, 8.507059e+37
    %v1808 = vand.u32 %v1795, 2147483648
    %v1809 = vor.u32 1.1754944e-38, %v1808
    %v1810 = vsel %vm1807, %v1809, %v1805
    %v1811 = vmul.f32 1.0, %v1810
    %v1812 = vrcp.pop %v1796
    %v1813 = vmul.f32 %v1796, %v1812
    %v1814 = vsub.f32 1.0, %v1813
    %v1815 = vmul.f32 %v1812, %v1814
    %v1816 = vadd.f32 %v1812, %v1815
    %vm1817 = vweird.f32 %v1796
    %vm1818 = vweird.f32 %v1812
    %vm1819 = vmor %vm1817, %vm1818
    %v1820 = vsel %vm1819, %v1812, %v1816
    %v1821 = vand.u32 2147483647, %v1796
    %vm1822 = vcmp.eq.f32.partialorder %v1821, 8.507059e+37
    %v1823 = vand.u32 %v1796, 2147483648
    %v1824 = vor.u32 1.1754944e-38, %v1823
    %v1825 = vsel %vm1822, %v1824, %v1820
    %v1826 = vmul.f32 1.0, %v1825
    %v1827 = vadd.f32 %v1784, %v1227
    %v1828 = vmul.f32 %v1811, %v1827
    %v1829 = vadd.f32 %v1432, %v1828
    %v1830 = vtanh.pop %v1829
    %v1831 = vsub.f32 %v1746, %v1830
    %v1832 = vmul.f32 %v1826, %v1831
    %v1833 = vadd.f32 %v1830, %v1832
    %v1834 = vpack.c.bf16 %v1833, %v1833
    %1835 = vmatpush.bf16.msra.mxu0 %v1547
    %1836 = vmatpush.bf16.msra.mxu0 %v1544
    %1837 = vmatpush.bf16.msra.mxu0 %v1541
    %1838 = vmatpush.bf16.msra.mxu0 %v1538
    %1839 = vmatpush.bf16.msra.mxu0 %v1535
    %1840 = vmatpush.bf16.msra.mxu0 %v1532
    %1841 = vmatpush.bf16.msra.mxu0 %v1529
    %1842 = vmatpush.bf16.msra.mxu0 %v1526
    %1843 = vmatmul.bf16.gmra.mxu0 %v1834
    %v1844 = vpop.f32.mrf.mxu0
    %v1845 = vadd.f32 0.0, %v1844
    %v1846 = vpop.f32.mrf.mxu0
    %1847 = vdwg.mxu0
    %1848 = vmatpush.bf16.msra.mxu0 %v1548
    %1849 = vmatpush.bf16.msra.mxu0 %v1545
    %1850 = vmatpush.bf16.msra.mxu0 %v1542
    %1851 = vmatpush.bf16.msra.mxu0 %v1539
    %1852 = vmatpush.bf16.msra.mxu0 %v1536
    %1853 = vmatpush.bf16.msra.mxu0 %v1533
    %1854 = vmatpush.bf16.msra.mxu0 %v1530
    %1855 = vmatpush.bf16.msra.mxu0 %v1527
    %1856 = vmatmul.bf16.gmra.mxu0 %v1834
    %v1857 = vpop.f32.mrf.mxu0
    %v1858 = vadd.f32 0.0, %v1857
    %v1859 = vpop.f32.mrf.mxu0
    %1860 = vdwg.mxu0
    %1861 = vmatpush.bf16.msra.mxu0 %v1549
    %1862 = vmatpush.bf16.msra.mxu0 %v1546
    %1863 = vmatpush.bf16.msra.mxu0 %v1543
    %1864 = vmatpush.bf16.msra.mxu0 %v1540
    %1865 = vmatpush.bf16.msra.mxu0 %v1537
    %1866 = vmatpush.bf16.msra.mxu0 %v1534
    %1867 = vmatpush.bf16.msra.mxu0 %v1531
    %1868 = vmatpush.bf16.msra.mxu0 %v1528
    %1869 = vmatmul.bf16.gmra.mxu0 %v1834
    %v1870 = vpop.f32.mrf.mxu0
    %v1871 = vadd.f32 0.0, %v1870
    %v1872 = vpop.f32.mrf.mxu0
    %1873 = vdwg.mxu0
    %v1874 = vadd.f32 %v1376, %v1845
    %v1875 = vadd.f32 %v1405, %v1858
    %v1876 = vxor.u32 %v1874, 2147483648
    %v1877 = vxor.u32 %v1875, 2147483648
    %v1878 = vmul.f32 %v1876, 1.442695
    %v1879 = vpow.pop %v1878
    %v1880 = vmul.f32 %v1877, 1.442695
    %v1881 = vpow.pop %v1880
    %v1882 = vadd.f32 %v1879, 1.0
    %v1883 = vadd.f32 %v1881, 1.0
    %v1884 = vrcp.pop %v1882
    %v1885 = vmul.f32 %v1882, %v1884
    %v1886 = vsub.f32 1.0, %v1885
    %v1887 = vmul.f32 %v1884, %v1886
    %v1888 = vadd.f32 %v1884, %v1887
    %vm1889 = vweird.f32 %v1882
    %vm1890 = vweird.f32 %v1884
    %vm1891 = vmor %vm1889, %vm1890
    %v1892 = vsel %vm1891, %v1884, %v1888
    %v1893 = vand.u32 2147483647, %v1882
    %vm1894 = vcmp.eq.f32.partialorder %v1893, 8.507059e+37
    %v1895 = vand.u32 %v1882, 2147483648
    %v1896 = vor.u32 1.1754944e-38, %v1895
    %v1897 = vsel %vm1894, %v1896, %v1892
    %v1898 = vmul.f32 1.0, %v1897
    %v1899 = vrcp.pop %v1883
    %v1900 = vmul.f32 %v1883, %v1899
    %v1901 = vsub.f32 1.0, %v1900
    %v1902 = vmul.f32 %v1899, %v1901
    %v1903 = vadd.f32 %v1899, %v1902
    %vm1904 = vweird.f32 %v1883
    %vm1905 = vweird.f32 %v1899
    %vm1906 = vmor %vm1904, %vm1905
    %v1907 = vsel %vm1906, %v1899, %v1903
    %v1908 = vand.u32 2147483647, %v1883
    %vm1909 = vcmp.eq.f32.partialorder %v1908, 8.507059e+37
    %v1910 = vand.u32 %v1883, 2147483648
    %v1911 = vor.u32 1.1754944e-38, %v1910
    %v1912 = vsel %vm1909, %v1911, %v1907
    %v1913 = vmul.f32 1.0, %v1912
    %v1914 = vadd.f32 %v1871, %v1227
    %v1915 = vmul.f32 %v1898, %v1914
    %v1916 = vadd.f32 %v1434, %v1915
    %v1917 = vtanh.pop %v1916
    %v1918 = vsub.f32 %v1833, %v1917
    %v1919 = vmul.f32 %v1913, %v1918
    %v1920 = vadd.f32 %v1917, %v1919
    %v1921 = vpack.c.bf16 %v1920, %v1920
    %1922 = vmatpush.bf16.msra.mxu0 %v1547
    %1923 = vmatpush.bf16.msra.mxu0 %v1544
    %1924 = vmatpush.bf16.msra.mxu0 %v1541
    %1925 = vmatpush.bf16.msra.mxu0 %v1538
    %1926 = vmatpush.bf16.msra.mxu0 %v1535
    %1927 = vmatpush.bf16.msra.mxu0 %v1532
    %1928 = vmatpush.bf16.msra.mxu0 %v1529
    %1929 = vmatpush.bf16.msra.mxu0 %v1526
    %1930 = vmatmul.bf16.gmra.mxu0 %v1921
    %v1931 = vpop.f32.mrf.mxu0
    %v1932 = vadd.f32 0.0, %v1931
    %v1933 = vpop.f32.mrf.mxu0
    %1934 = vdwg.mxu0
    %1935 = vmatpush.bf16.msra.mxu0 %v1548
    %1936 = vmatpush.bf16.msra.mxu0 %v1545
    %1937 = vmatpush.bf16.msra.mxu0 %v1542
    %1938 = vmatpush.bf16.msra.mxu0 %v1539
    %1939 = vmatpush.bf16.msra.mxu0 %v1536
    %1940 = vmatpush.bf16.msra.mxu0 %v1533
    %1941 = vmatpush.bf16.msra.mxu0 %v1530
    %1942 = vmatpush.bf16.msra.mxu0 %v1527
    %1943 = vmatmul.bf16.gmra.mxu0 %v1921
    %v1944 = vpop.f32.mrf.mxu0
    %v1945 = vadd.f32 0.0, %v1944
    %v1946 = vpop.f32.mrf.mxu0
    %1947 = vdwg.mxu0
    %1948 = vmatpush.bf16.msra.mxu0 %v1549
    %1949 = vmatpush.bf16.msra.mxu0 %v1546
    %1950 = vmatpush.bf16.msra.mxu0 %v1543
    %1951 = vmatpush.bf16.msra.mxu0 %v1540
    %1952 = vmatpush.bf16.msra.mxu0 %v1537
    %1953 = vmatpush.bf16.msra.mxu0 %v1534
    %1954 = vmatpush.bf16.msra.mxu0 %v1531
    %1955 = vmatpush.bf16.msra.mxu0 %v1528
    %1956 = vmatmul.bf16.gmra.mxu0 %v1921
    %v1957 = vpop.f32.mrf.mxu0
    %v1958 = vadd.f32 0.0, %v1957
    %v1959 = vpop.f32.mrf.mxu0
    %1960 = vdwg.mxu0
    %v1961 = vadd.f32 %v1379, %v1932
    %v1962 = vadd.f32 %v1408, %v1945
    %v1963 = vxor.u32 %v1961, 2147483648
    %v1964 = vxor.u32 %v1962, 2147483648
    %v1965 = vmul.f32 %v1963, 1.442695
    %v1966 = vpow.pop %v1965
    %v1967 = vmul.f32 %v1964, 1.442695
    %v1968 = vpow.pop %v1967
    %v1969 = vadd.f32 %v1966, 1.0
    %v1970 = vadd.f32 %v1968, 1.0
    %v1971 = vrcp.pop %v1969
    %v1972 = vmul.f32 %v1969, %v1971
    %v1973 = vsub.f32 1.0, %v1972
    %v1974 = vmul.f32 %v1971, %v1973
    %v1975 = vadd.f32 %v1971, %v1974
    %vm1976 = vweird.f32 %v1969
    %vm1977 = vweird.f32 %v1971
    %vm1978 = vmor %vm1976, %vm1977
    %v1979 = vsel %vm1978, %v1971, %v1975
    %v1980 = vand.u32 2147483647, %v1969
    %vm1981 = vcmp.eq.f32.partialorder %v1980, 8.507059e+37
    %v1982 = vand.u32 %v1969, 2147483648
    %v1983 = vor.u32 1.1754944e-38, %v1982
    %v1984 = vsel %vm1981, %v1983, %v1979
    %v1985 = vmul.f32 1.0, %v1984
    %v1986 = vrcp.pop %v1970
    %v1987 = vmul.f32 %v1970, %v1986
    %v1988 = vsub.f32 1.0, %v1987
    %v1989 = vmul.f32 %v1986, %v1988
    %v1990 = vadd.f32 %v1986, %v1989
    %vm1991 = vweird.f32 %v1970
    %vm1992 = vweird.f32 %v1986
    %vm1993 = vmor %vm1991, %vm1992
    %v1994 = vsel %vm1993, %v1986, %v1990
    %v1995 = vand.u32 2147483647, %v1970
    %vm1996 = vcmp.eq.f32.partialorder %v1995, 8.507059e+37
    %v1997 = vand.u32 %v1970, 2147483648
    %v1998 = vor.u32 1.1754944e-38, %v1997
    %v1999 = vsel %vm1996, %v1998, %v1994
    %v2000 = vmul.f32 1.0, %v1999
    %v2001 = vadd.f32 %v1958, %v1227
    %v2002 = vmul.f32 %v1985, %v2001
    %v2003 = vadd.f32 %v1437, %v2002
    %v2004 = vtanh.pop %v2003
    %v2005 = vsub.f32 %v1920, %v2004
    %v2006 = vmul.f32 %v2000, %v2005
    %v2007 = vadd.f32 %v2004, %v2006
    %v2008 = vpack.c.bf16 %v2007, %v2007
    %2009 = vmatpush.bf16.msra.mxu0 %v1547
    %2010 = vmatpush.bf16.msra.mxu0 %v1544
    %2011 = vmatpush.bf16.msra.mxu0 %v1541
    %2012 = vmatpush.bf16.msra.mxu0 %v1538
    %2013 = vmatpush.bf16.msra.mxu0 %v1535
    %2014 = vmatpush.bf16.msra.mxu0 %v1532
    %2015 = vmatpush.bf16.msra.mxu0 %v1529
    %2016 = vmatpush.bf16.msra.mxu0 %v1526
    %2017 = vmatmul.bf16.gmra.mxu0 %v2008
    %v2018 = vpop.f32.mrf.mxu0
    %v2019 = vadd.f32 0.0, %v2018
    %v2020 = vpop.f32.mrf.mxu0
    %2021 = vdwg.mxu0
    %2022 = vmatpush.bf16.msra.mxu0 %v1548
    %2023 = vmatpush.bf16.msra.mxu0 %v1545
    %2024 = vmatpush.bf16.msra.mxu0 %v1542
    %2025 = vmatpush.bf16.msra.mxu0 %v1539
    %2026 = vmatpush.bf16.msra.mxu0 %v1536
    %2027 = vmatpush.bf16.msra.mxu0 %v1533
    %2028 = vmatpush.bf16.msra.mxu0 %v1530
    %2029 = vmatpush.bf16.msra.mxu0 %v1527
    %2030 = vmatmul.bf16.gmra.mxu0 %v2008
    %v2031 = vpop.f32.mrf.mxu0
    %v2032 = vadd.f32 0.0, %v2031
    %v2033 = vpop.f32.mrf.mxu0
    %2034 = vdwg.mxu0
    %2035 = vmatpush.bf16.msra.mxu0 %v1549
    %2036 = vmatpush.bf16.msra.mxu0 %v1546
    %2037 = vmatpush.bf16.msra.mxu0 %v1543
    %2038 = vmatpush.bf16.msra.mxu0 %v1540
    %2039 = vmatpush.bf16.msra.mxu0 %v1537
    %2040 = vmatpush.bf16.msra.mxu0 %v1534
    %2041 = vmatpush.bf16.msra.mxu0 %v1531
    %2042 = vmatpush.bf16.msra.mxu0 %v1528
    %2043 = vmatmul.bf16.gmra.mxu0 %v2008
    %v2044 = vpop.f32.mrf.mxu0
    %v2045 = vadd.f32 0.0, %v2044
    %v2046 = vpop.f32.mrf.mxu0
    %2047 = vdwg.mxu0
    %v2048 = vadd.f32 %v1381, %v2019
    %v2049 = vadd.f32 %v1410, %v2032
    %v2050 = vxor.u32 %v2048, 2147483648
    %v2051 = vxor.u32 %v2049, 2147483648
    %v2052 = vmul.f32 %v2050, 1.442695
    %v2053 = vpow.pop %v2052
    %v2054 = vmul.f32 %v2051, 1.442695
    %v2055 = vpow.pop %v2054
    %v2056 = vadd.f32 %v2053, 1.0
    %v2057 = vadd.f32 %v2055, 1.0
    %v2058 = vrcp.pop %v2056
    %v2059 = vmul.f32 %v2056, %v2058
    %v2060 = vsub.f32 1.0, %v2059
    %v2061 = vmul.f32 %v2058, %v2060
    %v2062 = vadd.f32 %v2058, %v2061
    %vm2063 = vweird.f32 %v2056
    %vm2064 = vweird.f32 %v2058
    %vm2065 = vmor %vm2063, %vm2064
    %v2066 = vsel %vm2065, %v2058, %v2062
    %v2067 = vand.u32 2147483647, %v2056
    %vm2068 = vcmp.eq.f32.partialorder %v2067, 8.507059e+37
    %v2069 = vand.u32 %v2056, 2147483648
    %v2070 = vor.u32 1.1754944e-38, %v2069
    %v2071 = vsel %vm2068, %v2070, %v2066
    %v2072 = vmul.f32 1.0, %v2071
    %v2073 = vrcp.pop %v2057
    %v2074 = vmul.f32 %v2057, %v2073
    %v2075 = vsub.f32 1.0, %v2074
    %v2076 = vmul.f32 %v2073, %v2075
    %v2077 = vadd.f32 %v2073, %v2076
    %vm2078 = vweird.f32 %v2057
    %vm2079 = vweird.f32 %v2073
    %vm2080 = vmor %vm2078, %vm2079
    %v2081 = vsel %vm2080, %v2073, %v2077
    %v2082 = vand.u32 2147483647, %v2057
    %vm2083 = vcmp.eq.f32.partialorder %v2082, 8.507059e+37
    %v2084 = vand.u32 %v2057, 2147483648
    %v2085 = vor.u32 1.1754944e-38, %v2084
    %v2086 = vsel %vm2083, %v2085, %v2081
    %v2087 = vmul.f32 1.0, %v2086
    %v2088 = vadd.f32 %v2045, %v1227
    %v2089 = vmul.f32 %v2072, %v2088
    %v2090 = vadd.f32 %v1439, %v2089
    %v2091 = vtanh.pop %v2090
    %v2092 = vsub.f32 %v2007, %v2091
    %v2093 = vmul.f32 %v2087, %v2092
    %v2094 = vadd.f32 %v2091, %v2093
    %v2095 = vpack.c.bf16 %v2094, %v2094
    %2096 = vmatpush.bf16.msra.mxu0 %v1547
    %2097 = vmatpush.bf16.msra.mxu0 %v1544
    %2098 = vmatpush.bf16.msra.mxu0 %v1541
    %2099 = vmatpush.bf16.msra.mxu0 %v1538
    %2100 = vmatpush.bf16.msra.mxu0 %v1535
    %2101 = vmatpush.bf16.msra.mxu0 %v1532
    %2102 = vmatpush.bf16.msra.mxu0 %v1529
    %2103 = vmatpush.bf16.msra.mxu0 %v1526
    %2104 = vmatmul.bf16.gmra.mxu0 %v2095
    %v2105 = vpop.f32.mrf.mxu0
    %v2106 = vadd.f32 0.0, %v2105
    %v2107 = vpop.f32.mrf.mxu0
    %2108 = vdwg.mxu0
    %2109 = vmatpush.bf16.msra.mxu0 %v1548
    %2110 = vmatpush.bf16.msra.mxu0 %v1545
    %2111 = vmatpush.bf16.msra.mxu0 %v1542
    %2112 = vmatpush.bf16.msra.mxu0 %v1539
    %2113 = vmatpush.bf16.msra.mxu0 %v1536
    %2114 = vmatpush.bf16.msra.mxu0 %v1533
    %2115 = vmatpush.bf16.msra.mxu0 %v1530
    %2116 = vmatpush.bf16.msra.mxu0 %v1527
    %2117 = vmatmul.bf16.gmra.mxu0 %v2095
    %v2118 = vpop.f32.mrf.mxu0
    %v2119 = vadd.f32 0.0, %v2118
    %v2120 = vpop.f32.mrf.mxu0
    %2121 = vdwg.mxu0
    %2122 = vmatpush.bf16.msra.mxu0 %v1549
    %2123 = vmatpush.bf16.msra.mxu0 %v1546
    %2124 = vmatpush.bf16.msra.mxu0 %v1543
    %2125 = vmatpush.bf16.msra.mxu0 %v1540
    %2126 = vmatpush.bf16.msra.mxu0 %v1537
    %2127 = vmatpush.bf16.msra.mxu0 %v1534
    %2128 = vmatpush.bf16.msra.mxu0 %v1531
    %2129 = vmatpush.bf16.msra.mxu0 %v1528
    %2130 = vmatmul.bf16.gmra.mxu0 %v2095
    %v2131 = vpop.f32.mrf.mxu0
    %v2132 = vadd.f32 0.0, %v2131
    %v2133 = vpop.f32.mrf.mxu0
    %2134 = vdwg.mxu0
    %v2135 = vadd.f32 %v1384, %v2106
    %v2136 = vadd.f32 %v1413, %v2119
    %v2137 = vxor.u32 %v2135, 2147483648
    %v2138 = vxor.u32 %v2136, 2147483648
    %v2139 = vmul.f32 %v2137, 1.442695
    %v2140 = vpow.pop %v2139
    %v2141 = vmul.f32 %v2138, 1.442695
    %v2142 = vpow.pop %v2141
    %v2143 = vadd.f32 %v2140, 1.0
    %v2144 = vadd.f32 %v2142, 1.0
    %v2145 = vrcp.pop %v2143
    %v2146 = vmul.f32 %v2143, %v2145
    %v2147 = vsub.f32 1.0, %v2146
    %v2148 = vmul.f32 %v2145, %v2147
    %v2149 = vadd.f32 %v2145, %v2148
    %vm2150 = vweird.f32 %v2143
    %vm2151 = vweird.f32 %v2145
    %vm2152 = vmor %vm2150, %vm2151
    %v2153 = vsel %vm2152, %v2145, %v2149
    %v2154 = vand.u32 2147483647, %v2143
    %vm2155 = vcmp.eq.f32.partialorder %v2154, 8.507059e+37
    %v2156 = vand.u32 %v2143, 2147483648
    %v2157 = vor.u32 1.1754944e-38, %v2156
    %v2158 = vsel %vm2155, %v2157, %v2153
    %v2159 = vmul.f32 1.0, %v2158
    %v2160 = vrcp.pop %v2144
    %v2161 = vmul.f32 %v2144, %v2160
    %v2162 = vsub.f32 1.0, %v2161
    %v2163 = vmul.f32 %v2160, %v2162
    %v2164 = vadd.f32 %v2160, %v2163
    %vm2165 = vweird.f32 %v2144
    %vm2166 = vweird.f32 %v2160
    %vm2167 = vmor %vm2165, %vm2166
    %v2168 = vsel %vm2167, %v2160, %v2164
    %v2169 = vand.u32 2147483647, %v2144
    %vm2170 = vcmp.eq.f32.partialorder %v2169, 8.507059e+37
    %v2171 = vand.u32 %v2144, 2147483648
    %v2172 = vor.u32 1.1754944e-38, %v2171
    %v2173 = vsel %vm2170, %v2172, %v2168
    %v2174 = vmul.f32 1.0, %v2173
    %v2175 = vadd.f32 %v2132, %v1227
    %v2176 = vmul.f32 %v2159, %v2175
    %v2177 = vadd.f32 %v1442, %v2176
    %v2178 = vtanh.pop %v2177
    %v2179 = vsub.f32 %v2094, %v2178
    %v2180 = vmul.f32 %v2174, %v2179
    %v2181 = vadd.f32 %v2178, %v2180
    %v2182 = vpack.c.bf16 %v2181, %v2181
    %2183 = vmatpush.bf16.msra.mxu0 %v1547
    %2184 = vmatpush.bf16.msra.mxu0 %v1544
    %2185 = vmatpush.bf16.msra.mxu0 %v1541
    %2186 = vmatpush.bf16.msra.mxu0 %v1538
    %2187 = vmatpush.bf16.msra.mxu0 %v1535
    %2188 = vmatpush.bf16.msra.mxu0 %v1532
    %2189 = vmatpush.bf16.msra.mxu0 %v1529
    %2190 = vmatpush.bf16.msra.mxu0 %v1526
    %2191 = vmatmul.bf16.gmra.mxu0 %v2182
    %v2192 = vpop.f32.mrf.mxu0
    %v2193 = vadd.f32 0.0, %v2192
    %v2194 = vpop.f32.mrf.mxu0
    %2195 = vdwg.mxu0
    %2196 = vmatpush.bf16.msra.mxu0 %v1548
    %2197 = vmatpush.bf16.msra.mxu0 %v1545
    %2198 = vmatpush.bf16.msra.mxu0 %v1542
    %2199 = vmatpush.bf16.msra.mxu0 %v1539
    %2200 = vmatpush.bf16.msra.mxu0 %v1536
    %2201 = vmatpush.bf16.msra.mxu0 %v1533
    %2202 = vmatpush.bf16.msra.mxu0 %v1530
    %2203 = vmatpush.bf16.msra.mxu0 %v1527
    %2204 = vmatmul.bf16.gmra.mxu0 %v2182
    %v2205 = vpop.f32.mrf.mxu0
    %v2206 = vadd.f32 0.0, %v2205
    %v2207 = vpop.f32.mrf.mxu0
    %2208 = vdwg.mxu0
    %2209 = vmatpush.bf16.msra.mxu0 %v1549
    %2210 = vmatpush.bf16.msra.mxu0 %v1546
    %2211 = vmatpush.bf16.msra.mxu0 %v1543
    %2212 = vmatpush.bf16.msra.mxu0 %v1540
    %2213 = vmatpush.bf16.msra.mxu0 %v1537
    %2214 = vmatpush.bf16.msra.mxu0 %v1534
    %2215 = vmatpush.bf16.msra.mxu0 %v1531
    %2216 = vmatpush.bf16.msra.mxu0 %v1528
    %2217 = vmatmul.bf16.gmra.mxu0 %v2182
    %v2218 = vpop.f32.mrf.mxu0
    %v2219 = vadd.f32 0.0, %v2218
    %v2220 = vpop.f32.mrf.mxu0
    %2221 = vdwg.mxu0
    %v2222 = vadd.f32 %v1386, %v2193
    %v2223 = vadd.f32 %v1415, %v2206
    %v2224 = vxor.u32 %v2222, 2147483648
    %v2225 = vxor.u32 %v2223, 2147483648
    %v2226 = vmul.f32 %v2224, 1.442695
    %v2227 = vpow.pop %v2226
    %v2228 = vmul.f32 %v2225, 1.442695
    %v2229 = vpow.pop %v2228
    %v2230 = vadd.f32 %v2227, 1.0
    %v2231 = vadd.f32 %v2229, 1.0
    %v2232 = vrcp.pop %v2230
    %v2233 = vmul.f32 %v2230, %v2232
    %v2234 = vsub.f32 1.0, %v2233
    %v2235 = vmul.f32 %v2232, %v2234
    %v2236 = vadd.f32 %v2232, %v2235
    %vm2237 = vweird.f32 %v2230
    %vm2238 = vweird.f32 %v2232
    %vm2239 = vmor %vm2237, %vm2238
    %v2240 = vsel %vm2239, %v2232, %v2236
    %v2241 = vand.u32 2147483647, %v2230
    %vm2242 = vcmp.eq.f32.partialorder %v2241, 8.507059e+37
    %v2243 = vand.u32 %v2230, 2147483648
    %v2244 = vor.u32 1.1754944e-38, %v2243
    %v2245 = vsel %vm2242, %v2244, %v2240
    %v2246 = vmul.f32 1.0, %v2245
    %v2247 = vrcp.pop %v2231
    %v2248 = vmul.f32 %v2231, %v2247
    %v2249 = vsub.f32 1.0, %v2248
    %v2250 = vmul.f32 %v2247, %v2249
    %v2251 = vadd.f32 %v2247, %v2250
    %vm2252 = vweird.f32 %v2231
    %vm2253 = vweird.f32 %v2247
    %vm2254 = vmor %vm2252, %vm2253
    %v2255 = vsel %vm2254, %v2247, %v2251
    %v2256 = vand.u32 2147483647, %v2231
    %vm2257 = vcmp.eq.f32.partialorder %v2256, 8.507059e+37
    %v2258 = vand.u32 %v2231, 2147483648
    %v2259 = vor.u32 1.1754944e-38, %v2258
    %v2260 = vsel %vm2257, %v2259, %v2255
    %v2261 = vmul.f32 1.0, %v2260
    %v2262 = vadd.f32 %v2219, %v1227
    %v2263 = vmul.f32 %v2246, %v2262
    %v2264 = vadd.f32 %v1444, %v2263
    %v2265 = vtanh.pop %v2264
    %v2266 = vsub.f32 %v2181, %v2265
    %v2267 = vmul.f32 %v2261, %v2266
    %v2268 = vadd.f32 %v2265, %v2267
    %s2269 = scalar_lea.vmem [#allocation2], 768
    %v2270 = vld [vmem:[%s2269] sm:$0xf]
    %v2271 = vld [vmem:[%s2269 + $0xc] sm:$0xf]
    %v2272 = vld [vmem:[%s2269 + $0x18] sm:$0xf]
    %v2273 = vld [vmem:[%s2269 + $0x24] sm:$0xf]
    %v2274 = vld [vmem:[%s2269 + $0x30] sm:$0xf]
    %v2275 = vld [vmem:[%s2269 + $0x3c] sm:$0xf]
    %v2276 = vld [vmem:[%s2269 + $0x48] sm:$0xf]
    %v2277 = vld [vmem:[%s2269 + $0x54] sm:$0xf]
    %v2278 = vld [vmem:[%s2269 + $0x60] sm:$0xf]
    %v2279 = vld [vmem:[%s2269 + $0x6c] sm:$0xf]
    %v2280 = vld [vmem:[%s2269 + $0x78] sm:$0xf]
    %v2281 = vld [vmem:[%s2269 + $0x84] sm:$0xf]
    %v2282 = vld [vmem:[%s2269 + $0x90] sm:$0xf]
    %v2283 = vld [vmem:[%s2269 + $0x9c] sm:$0xf]
    %v2284 = vld [vmem:[%s2269 + $0xa8] sm:$0xf]
    %v2285 = vld [vmem:[%s2269 + $0xb4] sm:$0xf]
    %s2286 = scalar_lea.vmem %s2, 48
    %v2287 = vld [vmem:[%s2286] sm:$0xff]
    %v2288 = vpack.c.bf16 %v2268, %v2268
    %v2289 = vperm.slane %v2287, 0
    %v2306 = vunpack.c.l.b16 %v2270
    %v2307 = vunpack.c.l.b16 %v2271
    %v2308 = vunpack.c.l.b16 %v2272
    %v2309 = vunpack.c.l.b16 %v2273
    %v2310 = vunpack.c.l.b16 %v2274
    %v2311 = vunpack.c.l.b16 %v2275
    %v2312 = vunpack.c.l.b16 %v2276
    %v2313 = vunpack.c.l.b16 %v2277
    %v2314 = vunpack.c.l.b16 %v2278
    %v2315 = vunpack.c.l.b16 %v2279
    %v2316 = vunpack.c.l.b16 %v2280
    %v2317 = vunpack.c.l.b16 %v2281
    %v2318 = vunpack.c.l.b16 %v2282
    %v2319 = vunpack.c.l.b16 %v2283
    %v2320 = vunpack.c.l.b16 %v2284
    %v2321 = vunpack.c.l.b16 %v2285
    %v2322 = vpack.c.b16 %v2307, %v2306
    %v2323 = vpack.c.b16 %v2309, %v2308
    %v2324 = vpack.c.b16 %v2311, %v2310
    %v2325 = vpack.c.b16 %v2313, %v2312
    %v2326 = vpack.c.b16 %v2315, %v2314
    %v2327 = vpack.c.b16 %v2317, %v2316
    %v2328 = vpack.c.b16 %v2319, %v2318
    %v2329 = vpack.c.b16 %v2321, %v2320
    %2338 = vmatpush.bf16.msra.mxu0 %v2329
    %2339 = vmatpush.bf16.msra.mxu0 %v2328
    %2340 = vmatpush.bf16.msra.mxu0 %v2327
    %2341 = vmatpush.bf16.msra.mxu0 %v2326
    %2342 = vmatpush.bf16.msra.mxu0 %v2325
    %2343 = vmatpush.bf16.msra.mxu0 %v2324
    %2344 = vmatpush.bf16.msra.mxu0 %v2323
    %2345 = vmatpush.bf16.msra.mxu0 %v2322
    %2346 = vmatmul.bf16.gmra.mxu0 %v2288
    %v2347 = vpop.f32.mrf.mxu0
    %v2348 = vadd.f32 %v2289, %v2347
    %v2349 = vpop.f32.mrf.mxu0
    %2350 = vdwg.mxu0
    %2351 = vst [vmem:[%s3] sm:$0xff] %v2348
    // Predicated region
    $region18: #{gru_model_forward.1} parent=1 // pred_check
      _
    $region19: #{gru_model_forward.1} parent=1 // pred_check_branch
      %2353 = sbr.rel (0) target = $region21
    $region20: #{gru_model_forward.1} parent=1 // pred_region
      _
    $region21: #{gru_model_forward.1} parent=1 // pred_fallthru
      _
    // Predicated region
    $region22: #{gru_model_forward.1} parent=1 // pred_check
      _
    $region23: #{gru_model_forward.1} parent=1 // pred_check_branch
      %2355 = sbr.rel (0) target = $region25
    $region24: #{gru_model_forward.1} parent=1 // pred_region
      _
    $region25: #{gru_model_forward.1} parent=1 // pred_fallthru
      _
    %2356 = vsyncpa [#allocation3], 1

</llo_original>
